<compile_context>
chip_gen: v6e
topology: v6e:2x2x1
jax: 0.10.0
libtpu: 0.0.40
codegen_flags: <defaults>
</compile_context>

<pallas_src>
import functools
import math

import numpy as np
import jax
import jax.numpy as jnp
from jax.experimental import pallas as pl
from jax.experimental.pallas import tpu as pltpu


# --------------------------------------------------------------------------
# Generation-aware compiler params
# --------------------------------------------------------------------------
def _vmem_limit_bytes():
    cap = None
    try:
        fn = getattr(pltpu, "get_tpu_info", None)
        if fn is not None:
            cap = getattr(fn(), "vmem_capacity_bytes", None)
    except Exception:
        cap = None
    if not cap:
        try:
            kind = jax.devices()[0].device_kind.lower()
        except Exception:
            kind = ""
        # v5e/v6e have 128 MiB physical VMEM; v7x only 64 MiB.
        cap = (128 if ("v5" in kind or "v6" in kind) else 64) * 1024 * 1024
    return int(min(cap * 3 // 4, 96 * 1024 * 1024))


_VMEM_LIMIT = _vmem_limit_bytes()


def _cp(dimension_semantics):
    return pltpu.CompilerParams(
        dimension_semantics=dimension_semantics,
        vmem_limit_bytes=_VMEM_LIMIT,
    )


def _round_up(v, m):
    return (v + m - 1) // m * m


def _tile_pad(dim, unit, cap):
    """tile = min(cap, round_up(dim, unit)); padded = round_up(dim, tile)."""
    t = min(cap, _round_up(dim, unit))
    return t, _round_up(dim, t)


def _tile_div(dim, unit, cap):
    """tile is a multiple of unit, <= cap, and divides round_up(dim, unit)."""
    padded = _round_up(dim, unit)
    d = padded // unit
    best = 1
    for f in range(1, d + 1):
        if unit * f > cap:
            break
        if d % f == 0:
            best = f
    return unit * best, padded


# --------------------------------------------------------------------------
# Pallas kernels
# --------------------------------------------------------------------------
def _mm1_kernel(relu, has_res):
    """Single-K-step matmul: one MXU dot + fused BN scale/bias (+res, +ReLU)."""
    def kernel(*refs):
        if has_res:
            x_ref, w_ref, sb_ref, res_ref, o_ref = refs
        else:
            x_ref, w_ref, sb_ref, o_ref = refs
        y = jnp.dot(x_ref[...], w_ref[...], preferred_element_type=jnp.float32)
        sb = sb_ref[...]                                   # (2, tn): [scale; bias]
        y = y * sb[0:1, :] + sb[1:2, :]
        if has_res:
            y = y + res_ref[...].astype(jnp.float32)
        if relu:
            y = jnp.maximum(y, 0.0)
        o_ref[...] = y.astype(o_ref.dtype)
    return kernel


def _mmk_kernel(relu, has_res):
    """Multi-K-step matmul with an f32 VMEM accumulator (init/finalize via pl.when)."""
    def kernel(*refs):
        if has_res:
            x_ref, w_ref, sb_ref, res_ref, o_ref, acc_ref = refs
        else:
            x_ref, w_ref, sb_ref, o_ref, acc_ref = refs

        @pl.when(pl.program_id(2) == 0)
        def _():
            acc_ref[...] = jnp.zeros_like(acc_ref)

        acc_ref[...] += jnp.dot(x_ref[...], w_ref[...],
                                preferred_element_type=jnp.float32)

        @pl.when(pl.program_id(2) == pl.num_programs(2) - 1)
        def _():
            sb = sb_ref[...]
            y = acc_ref[...] * sb[0:1, :] + sb[1:2, :]
            if has_res:
                y = y + res_ref[...].astype(jnp.float32)
            if relu:
                y = jnp.maximum(y, 0.0)
            o_ref[...] = y.astype(o_ref.dtype)
    return kernel


def _row_interp_kernel(m_ref, x_ref, o_ref):
    # Row interpolation: left-matmul by the (So, Si) interp matrix on a lane tile.
    o_ref[0] = jnp.dot(m_ref[...], x_ref[0],
                       preferred_element_type=jnp.float32).astype(o_ref.dtype)


def _col_interp_kernel(th):
    # Column interpolation done row-by-row: (Wo, W) @ (W, C) per spatial row,
    # so no transposes are needed anywhere (in-kernel or in HBM).
    def kernel(cm_ref, x_ref, o_ref):
        cm = cm_ref[...]
        for i in range(th):
            o_ref[0, i] = jnp.dot(cm, x_ref[0, i],
                                  preferred_element_type=jnp.float32).astype(o_ref.dtype)
    return kernel


def _maxpool_kernel(x_ref, o_ref):
    # x_ref block: (1, 9, tM, C) -> max over the 9 (already stride-2) window taps.
    o_ref[0] = jnp.max(x_ref[0], axis=0)


def _afb_fuse_kernel(n_minus, e):
    def kernel(x_ref, y_ref, z_ref, o_ref):
        x = x_ref[0].astype(jnp.float32)
        y = y_ref[0].astype(jnp.float32)
        z = z_ref[0].astype(jnp.float32)
        xyz = x + y + z
        mu = jnp.mean(xyz, axis=0, keepdims=True)            # per-channel spatial mean
        d2 = (xyz - mu) ** 2
        att = d2 / (4.0 * (jnp.sum(d2, axis=0, keepdims=True) / n_minus + e)) + 0.5
        wei = xyz * jax.nn.sigmoid(att)                       # Simam(xyz)
        o_ref[0] = (x * wei + (y + z) * ((1.0 - wei) * 0.5)).astype(o_ref.dtype)
    return kernel


def _classifier_upsample_kernel(w_ref, r_ref, ct_ref, x_ref, b_ref, o_ref):
    # Fused: 1x1 classifier (C -> 1) + separable 4x bilinear upsample + sigmoid.
    x = x_ref[0].astype(jnp.float32)                          # (H, W, C)
    w = w_ref[...].astype(jnp.float32)                        # (1, C)
    s = jnp.sum(x * w.reshape(1, 1, -1), axis=-1) + b_ref[0]  # (H, W)
    t = jnp.dot(r_ref[...], s, preferred_element_type=jnp.float32)    # (Ho, W)
    y = jnp.dot(t, ct_ref[...], preferred_element_type=jnp.float32)   # (Ho, Wo)
    o_ref[0] = jax.nn.sigmoid(y)


# --------------------------------------------------------------------------
# Jitted wrappers around pallas_call
# --------------------------------------------------------------------------
@functools.partial(jax.jit, static_argnames=("relu", "has_res", "out_dtype"))
def _conv_matmul_call(xc, w2, sb, res, *, relu, has_res, out_dtype):
    """xc: (N*M, K) bf16 im2col; w2: (K, Cout) bf16; sb: (2, Cout) f32.
    Batch is already collapsed into M so MXU rows stay full in deep layers."""
    M, K = xc.shape
    Cout = w2.shape[1]

    tm, Mp = _tile_pad(M, 8, 512)
    Kp0 = _round_up(K, 128)
    if Kp0 <= 2048:
        tk, Kp = Kp0, Kp0
    else:
        tk, Kp = _tile_div(K, 128, 2048)
    Cp0 = _round_up(Cout, 128)
    if Cp0 <= 512:
        tn, Cp = Cp0, Cp0
    else:
        tn, Cp = _tile_div(Cout, 128, 512)

    xb = xc if (Mp == M and Kp == K) else jnp.pad(xc, ((0, Mp - M), (0, Kp - K)))
    wb = w2 if (Kp == K and Cp == Cout) else jnp.pad(w2, ((0, Kp - K), (0, Cp - Cout)))
    sbp = sb if Cp == Cout else jnp.pad(sb, ((0, 0), (0, Cp - Cout)))

    nk = Kp // tk
    inputs = [xb, wb, sbp]

    if has_res:
        rp = res if (Mp == M and Cp == Cout) else jnp.pad(
            res, ((0, Mp - M), (0, Cp - Cout)))

    if nk == 1:
        in_specs = [pl.BlockSpec((tm, tk), lambda mi, ci: (mi, 0)),
                    pl.BlockSpec((tk, tn), lambda mi, ci: (0, ci)),
                    pl.BlockSpec((2, tn), lambda mi, ci: (0, ci))]
        if has_res:
            inputs.append(rp)
            in_specs.append(pl.BlockSpec((tm, tn), lambda mi, ci: (mi, ci)))
        out = pl.pallas_call(
            _mm1_kernel(relu, has_res),
            out_shape=jax.ShapeDtypeStruct((Mp, Cp), out_dtype),
            grid=(Mp // tm, Cp // tn),
            in_specs=in_specs,
            out_specs=pl.BlockSpec((tm, tn), lambda mi, ci: (mi, ci)),
            compiler_params=_cp(("parallel", "parallel")),
        )(*inputs)
    else:
        in_specs = [pl.BlockSpec((tm, tk), lambda mi, ci, ki: (mi, ki)),
                    pl.BlockSpec((tk, tn), lambda mi, ci, ki: (ki, ci)),
                    pl.BlockSpec((2, tn), lambda mi, ci, ki: (0, ci))]
        if has_res:
            inputs.append(rp)
            in_specs.append(pl.BlockSpec((tm, tn), lambda mi, ci, ki: (mi, ci)))
        out = pl.pallas_call(
            _mmk_kernel(relu, has_res),
            out_shape=jax.ShapeDtypeStruct((Mp, Cp), out_dtype),
            grid=(Mp // tm, Cp // tn, nk),
            in_specs=in_specs,
            out_specs=pl.BlockSpec((tm, tn), lambda mi, ci, ki: (mi, ci)),
            scratch_shapes=[pltpu.VMEM((tm, tn), jnp.float32)],
            compiler_params=_cp(("parallel", "parallel", "arbitrary")),
        )(*inputs)

    if Mp != M or Cp != Cout:
        out = out[:M, :Cout]
    return out


@jax.jit
def _row_interp_call(m, x):
    """x: (N, Si, L); out: (N, So, L) = m @ x per image; lane-tiled over L."""
    N, Si, L = x.shape
    So = m.shape[0]
    tL, Lp = _tile_pad(L, 128, 4096)
    xb = x if Lp == L else jnp.pad(x, ((0, 0), (0, 0), (0, Lp - L)))
    mb = m.astype(x.dtype)
    out = pl.pallas_call(
        _row_interp_kernel,
        out_shape=jax.ShapeDtypeStruct((N, So, Lp), x.dtype),
        grid=(N, Lp // tL),
        in_specs=[pl.BlockSpec((So, Si), lambda n, li: (0, 0)),
                  pl.BlockSpec((1, Si, tL), lambda n, li: (n, 0, li))],
        out_specs=pl.BlockSpec((1, So, tL), lambda n, li: (n, 0, li)),
        compiler_params=_cp(("parallel", "parallel")),
    )(mb, xb)
    if Lp != L:
        out = out[:, :, :L]
    return out


@jax.jit
def _col_interp_call(cm, x):
    """x: (N, H, W, C); out: (N, H, Wo, C); per-row (Wo,W)@(W,C) dots."""
    N, H, W, C = x.shape
    Wo = cm.shape[0]
    th = math.gcd(H, 8)
    cmb = cm.astype(x.dtype)
    return pl.pallas_call(
        _col_interp_kernel(th),
        out_shape=jax.ShapeDtypeStruct((N, H, Wo, C), x.dtype),
        grid=(N, H // th),
        in_specs=[pl.BlockSpec((Wo, W), lambda n, h: (0, 0)),
                  pl.BlockSpec((1, th, W, C), lambda n, h: (n, h, 0, 0))],
        out_specs=pl.BlockSpec((1, th, Wo, C), lambda n, h: (n, h, 0, 0)),
        compiler_params=_cp(("parallel", "parallel")),
    )(cmb, x)


@jax.jit
def _maxpool_call(xs):
    N, T, M, C = xs.shape
    tM, Mp = _tile_pad(M, 8, 2048)
    xsp = xs if Mp == M else jnp.pad(xs, ((0, 0), (0, 0), (0, Mp - M), (0, 0)))
    out = pl.pallas_call(
        _maxpool_kernel,
        out_shape=jax.ShapeDtypeStruct((N, Mp, C), xs.dtype),
        grid=(N, Mp // tM),
        in_specs=[pl.BlockSpec((1, T, tM, C), lambda n, m: (n, 0, m, 0))],
        out_specs=pl.BlockSpec((1, tM, C), lambda n, m: (n, m, 0)),
        compiler_params=_cp(("parallel", "parallel")),
    )(xsp)
    if Mp != M:
        out = out[:, :M, :]
    return out


@functools.partial(jax.jit, static_argnames=("n_minus", "e"))
def _afb_fuse_call(xf, yf, zf, *, n_minus, e):
    N, M, C = xf.shape
    return pl.pallas_call(
        _afb_fuse_kernel(n_minus, e),
        out_shape=jax.ShapeDtypeStruct((N, M, C), xf.dtype),
        grid=(N,),
        in_specs=[pl.BlockSpec((1, M, C), lambda n: (n, 0, 0))] * 3,
        out_specs=pl.BlockSpec((1, M, C), lambda n: (n, 0, 0)),
        compiler_params=_cp(("parallel",)),
    )(xf, yf, zf)


@jax.jit
def _classifier_upsample_call(x, w, b):
    N, H, W, C = x.shape
    Ho, Wo = H * 4, W * 4
    R = jnp.asarray(_interp_matrix_1d(Ho, H))
    CmT = jnp.asarray(_interp_matrix_1d(Wo, W).T)
    return pl.pallas_call(
        _classifier_upsample_kernel,
        out_shape=jax.ShapeDtypeStruct((N, Ho, Wo), jnp.float32),
        grid=(N,),
        in_specs=[
            pl.BlockSpec((1, C), lambda n: (0, 0)),
            pl.BlockSpec((Ho, H), lambda n: (0, 0)),
            pl.BlockSpec((W, Wo), lambda n: (0, 0)),
            pl.BlockSpec((1, H, W, C), lambda n: (n, 0, 0, 0)),
            pl.BlockSpec(memory_space=pltpu.MemorySpace.SMEM),
        ],
        out_specs=pl.BlockSpec((1, Ho, Wo), lambda n: (n, 0, 0)),
        compiler_params=_cp(("parallel",)),
    )(w.reshape(1, C), R, CmT, x, b)


# --------------------------------------------------------------------------
# Layer wrappers (glue: padding / stride-aware im2col / reshapes in plain JAX)
# --------------------------------------------------------------------------
def conv2d_nhwc(x, w, scale, bias, *, stride=(1, 1), padding=(0, 0),
                dilation=(1, 1), relu=False, residual=None,
                out_dtype=jnp.bfloat16):
    """Conv (no bias) with folded per-channel scale/bias, optional residual add
    (before ReLU) and optional ReLU.  Activations are cast to bf16 BEFORE the
    im2col so the (kh*kw)x-sized gather is half-width in HBM."""
    N, H, W, Cin = x.shape
    kh, kw, _, Cout = w.shape
    ph, pw = padding
    dh, dw = dilation
    sh, sw = stride
    Ho = (H + 2 * ph - dh * (kh - 1) - 1) // sh + 1
    Wo = (W + 2 * pw - dw * (kw - 1) - 1) // sw + 1

    xb = x.astype(jnp.bfloat16)
    xp = jnp.pad(xb, ((0, 0), (ph, ph), (pw, pw), (0, 0))) if (ph or pw) else xb
    cols = []
    for i in range(kh):
        for j in range(kw):
            r0, c0 = i * dh, j * dw
            cols.append(xp[:, r0:r0 + (Ho - 1) * sh + 1:sh,
                           c0:c0 + (Wo - 1) * sw + 1:sw, :])
    xc = cols[0] if len(cols) == 1 else jnp.concatenate(cols, axis=-1)
    xc = xc.reshape(N * Ho * Wo, kh * kw * Cin)
    w2 = w.reshape(kh * kw * Cin, Cout).astype(jnp.bfloat16)
    sb = jnp.stack([scale, bias]).astype(jnp.float32)
    res = (residual.reshape(N * Ho * Wo, Cout).astype(jnp.bfloat16)
           if residual is not None else None)
    out = _conv_matmul_call(xc, w2, sb, res, relu=relu,
                            has_res=residual is not None, out_dtype=out_dtype)
    return out.reshape(N, Ho, Wo, Cout)


def apply_basic_conv2d(p, x):
    return conv2d_nhwc(x, p["w"], p["scale"], p["bias"], stride=p["stride"],
                       padding=p["padding"], dilation=p["dilation"],
                       relu=p["relu"])


def maxpool_3x3_s2_p1(x):
    # TODO(synk): the 9 taps are still stacked in HBM (bf16); a strided in-kernel
    #             gather would remove that pass entirely.
    N, H, W, C = x.shape
    Ho = (H - 1) // 2 + 1
    Wo = (W - 1) // 2 + 1
    xb = x.astype(jnp.bfloat16)
    xp = jnp.pad(xb, ((0, 0), (1, 1), (1, 1), (0, 0)), constant_values=-np.inf)
    taps = [xp[:, i:i + (Ho - 1) * 2 + 1:2, j:j + (Wo - 1) * 2 + 1:2, :]
            for i in range(3) for j in range(3)]
    xs = jnp.stack(taps, axis=1).reshape(N, 9, Ho * Wo, C)
    return _maxpool_call(xs).reshape(N, Ho, Wo, C)


def _interp_matrix_1d(out_size, in_size):
    # PyTorch bilinear, align_corners=False
    scale = in_size / out_size
    L = np.zeros((out_size, in_size), np.float32)
    for d in range(out_size):
        src = max((d + 0.5) * scale - 0.5, 0.0)
        i0 = min(int(np.floor(src)), in_size - 1)
        i1 = min(i0 + 1, in_size - 1)
        lam = src - i0
        L[d, i0] += 1.0 - lam
        L[d, i1] += lam
    return L


def bilinear_upsample(x, scale_factor):
    """Separable bilinear upsample (align_corners=False): per-row column interp
    then a row-interp matmul — two Pallas kernels, no HBM transposes."""
    if scale_factor == 1:
        return x  # F.interpolate(scale_factor=1, bilinear, align_corners=False) is identity
    N, H, W, C = x.shape
    Ho, Wo = int(H * scale_factor), int(W * scale_factor)
    Cm = jnp.asarray(_interp_matrix_1d(Wo, W))
    R = jnp.asarray(_interp_matrix_1d(Ho, H))
    t = _col_interp_call(Cm, x)                               # (N, H, Wo, C)
    u = _row_interp_call(R, t.reshape(N, H, Wo * C))          # (N, Ho, Wo*C)
    return u.reshape(N, Ho, Wo, C)


# --------------------------------------------------------------------------
# Deterministic parameter construction
# --------------------------------------------------------------------------
class _PG:
    def __init__(self, seed):
        self._key = jax.random.PRNGKey(seed)
        self._i = 0

    def next(self):
        self._i += 1
        return jax.random.fold_in(self._key, self._i)


def basic_conv2d_params(pg, cin, cout, ksize, *, stride=1, padding=0,
                        dilation=1, relu=False, bn=True):
    kh, kw = (ksize, ksize) if isinstance(ksize, int) else ksize
    ph, pw = (padding, padding) if isinstance(padding, int) else padding
    dh, dw = (dilation, dilation) if isinstance(dilation, int) else dilation
    sh, sw = (stride, stride) if isinstance(stride, int) else stride
    fan_in = kh * kw * cin
    w = jax.random.normal(pg.next(), (kh, kw, cin, cout), jnp.float32) / np.sqrt(fan_in)
    if bn:
        gamma = 1.0 + 0.1 * jax.random.normal(pg.next(), (cout,), jnp.float32)
        beta = 0.1 * jax.random.normal(pg.next(), (cout,), jnp.float32)
        rmean = 0.1 * jax.random.normal(pg.next(), (cout,), jnp.float32)
        rvar = 1.0 + 0.1 * jax.random.uniform(pg.next(), (cout,), jnp.float32)
        scale = gamma / jnp.sqrt(rvar + 1e-5)   # eval-mode BN folded into the conv
        bias = beta - rmean * scale
    else:
        scale = jnp.ones((cout,), jnp.float32)
        bias = jnp.zeros((cout,), jnp.float32)
    return dict(w=w, scale=scale, bias=bias, padding=(ph, pw),
                dilation=(dh, dw), stride=(sh, sw), relu=relu)


def rfb_m_params(pg, cin, cout):
    return dict(
        branch0=[basic_conv2d_params(pg, cin, cout, 1)],
        branch1=[basic_conv2d_params(pg, cin, cout, 1),
                 basic_conv2d_params(pg, cout, cout, (1, 3), padding=(0, 1)),
                 basic_conv2d_params(pg, cout, cout, (3, 1), padding=(1, 0)),
                 basic_conv2d_params(pg, cout, cout, 3, padding=3, dilation=3)],
        branch2=[basic_conv2d_params(pg, cin, cout, 1),
                 basic_conv2d_params(pg, cout, cout, (1, 5), padding=(0, 2)),
                 basic_conv2d_params(pg, cout, cout, (5, 1), padding=(2, 0)),
                 basic_conv2d_params(pg, cout, cout, 3, padding=5, dilation=5)],
        branch3=[basic_conv2d_params(pg, cin, cout, 1),
                 basic_conv2d_params(pg, cout, cout, (1, 7), padding=(0, 3)),
                 basic_conv2d_params(pg, cout, cout, (7, 1), padding=(3, 0)),
                 basic_conv2d_params(pg, cout, cout, 3, padding=7, dilation=7)],
        conv_cat=basic_conv2d_params(pg, 4 * cout, cout, 3, padding=1),
        conv_res=basic_conv2d_params(pg, cin, cout, 1),
    )


def rfb_m_forward(p, x):
    c = p["branch0"][0]["w"].shape[-1]
    # Fuse the five 1x1 entry convs (branch0..3 entries + conv_res) into one
    # lane-dense matmul (Cout = 5*c), then split.
    entries = [p["branch0"][0], p["branch1"][0], p["branch2"][0],
               p["branch3"][0], p["conv_res"]]
    w = jnp.concatenate([q["w"] for q in entries], axis=-1)
    scale = jnp.concatenate([q["scale"] for q in entries])
    bias = jnp.concatenate([q["bias"] for q in entries])
    fused = conv2d_nhwc(x, w, scale, bias, relu=False)
    x0 = fused[..., 0 * c:1 * c]
    b1 = fused[..., 1 * c:2 * c]
    b2 = fused[..., 2 * c:3 * c]
    b3 = fused[..., 3 * c:4 * c]
    x_res = fused[..., 4 * c:5 * c]

    def seq(ps, t):
        for q in ps:
            t = apply_basic_conv2d(q, t)
        return t

    x1 = seq(p["branch1"][1:], b1)
    x2 = seq(p["branch2"][1:], b2)
    x3 = seq(p["branch3"][1:], b3)
    q = p["conv_cat"]
    # relu(conv_cat(...) + conv_res(x)) fused into the conv_cat matmul epilogue.
    return conv2d_nhwc(jnp.concatenate([x0, x1, x2, x3], axis=-1),
                       q["w"], q["scale"], q["bias"], stride=q["stride"],
                       padding=q["padding"], dilation=q["dilation"],
                       relu=True, residual=x_res)


def afb_params(pg, sf1, sf2, channel=64):
    return dict(sf1=sf1, sf2=sf2, e=1e-4,
                conv=basic_conv2d_params(pg, channel, channel, 3, padding=1, relu=True))


def afb_forward(p, x, y, z):
    y = bilinear_upsample(y, p["sf1"])
    z = bilinear_upsample(z, p["sf2"])
    N, H, W, C = x.shape
    fused = _afb_fuse_call(x.reshape(N, H * W, C).astype(jnp.bfloat16),
                           y.reshape(N, H * W, C).astype(jnp.bfloat16),
                           z.reshape(N, H * W, C).astype(jnp.bfloat16),
                           n_minus=float(H * W - 1), e=float(p["e"]))
    return apply_basic_conv2d(p["conv"], fused.reshape(N, H, W, C))


def decoder1_params(pg, channel=64):
    return dict(conv=basic_conv2d_params(pg, channel, channel, 3, padding=1, relu=True))


def decoder1_forward(p, x):
    return apply_basic_conv2d(p["conv"], bilinear_upsample(x, 4))


def decoder2_params(pg, cin=128, cout=64):
    return dict(conv1=basic_conv2d_params(pg, cin, cout, 3, padding=1, relu=True),
                conv2=basic_conv2d_params(pg, cout, cout, 3, padding=1, relu=True))


def decoder2_forward(p, x):
    x = apply_basic_conv2d(p["conv1"], x)
    x = bilinear_upsample(x, 2)
    return apply_basic_conv2d(p["conv2"], x)


def watersnet_params(seed=0, channel=64):
    pg = _PG(seed)
    backbone = dict(  # surrogate res2net stages (see TODO at top of file)
        conv1=basic_conv2d_params(pg, 3, 64, 7, stride=2, padding=3, relu=True),
        layer1=basic_conv2d_params(pg, 64, 256, 1, relu=True),
        layer2=basic_conv2d_params(pg, 256, 512, 1, stride=2, relu=True),
        layer3=basic_conv2d_params(pg, 512, 1024, 1, stride=2, relu=True),
        layer4=basic_conv2d_params(pg, 1024, 2048, 1, stride=2, relu=True),
    )
    classifier = dict(  # nn.Conv2d(128, 1, 1) with bias; fused into the final kernel
        w=0.05 * jax.random.normal(pg.next(), (128,), jnp.float32),
        b=0.05 * jax.random.normal(pg.next(), (1,), jnp.float32),
    )
    return dict(
        backbone=backbone,
        rfb1=rfb_m_params(pg, 64, channel),
        rfb2=rfb_m_params(pg, 256, channel),
        rfb3=rfb_m_params(pg, 512, channel),
        rfb4=rfb_m_params(pg, 1024, channel),
        rfb5=rfb_m_params(pg, 2048, channel),
        afb123=afb_params(pg, 1, 2, channel),
        afb345=afb_params(pg, 2, 4, channel),
        decoder1=decoder1_params(pg, channel),
        decoder2=decoder2_params(pg, 128, 64),
        upconv123=basic_conv2d_params(pg, 64, 64, 3, padding=1, relu=True),
        upconv345=basic_conv2d_params(pg, 64, 64, 3, padding=1, relu=True),
        classifier=classifier,
    )


def watersnet_forward(params, x_nchw):
    x = jnp.transpose(x_nchw, (0, 2, 3, 1)).astype(jnp.float32)  # NCHW -> NHWC
    bb = params["backbone"]
    x = apply_basic_conv2d(bb["conv1"], x)       # /2
    x = maxpool_3x3_s2_p1(x)                     # /4, 64 ch
    x1_rfb = rfb_m_forward(params["rfb1"], x)
    x = apply_basic_conv2d(bb["layer1"], x)      # /4, 256 ch
    x2_rfb = rfb_m_forward(params["rfb2"], x)
    x = apply_basic_conv2d(bb["layer2"], x)      # /8, 512 ch
    x3_rfb = rfb_m_forward(params["rfb3"], x)
    x = apply_basic_conv2d(bb["layer3"], x)      # /16, 1024 ch
    x4_rfb = rfb_m_forward(params["rfb4"], x)
    x = apply_basic_conv2d(bb["layer4"], x)      # /32, 2048 ch
    x5_rfb = rfb_m_forward(params["rfb5"], x)

    x123 = afb_forward(params["afb123"], x1_rfb, x2_rfb, x3_rfb)
    x345 = afb_forward(params["afb345"], x3_rfb, x4_rfb, x5_rfb)

    d32 = jnp.concatenate([apply_basic_conv2d(params["upconv345"], x345),
                           decoder1_forward(params["decoder1"], x5_rfb)], axis=-1)
    d21 = jnp.concatenate([apply_basic_conv2d(params["upconv123"], x123),
                           decoder2_forward(params["decoder2"], d32)], axis=-1)
    cls = params["classifier"]
    # classifier (1x1, 128->1) + 4x bilinear upsample + sigmoid in one kernel
    out = _classifier_upsample_call(d21, cls["w"], cls["b"])   # (N, 4H, 4W) f32
    return out[:, None, :, :]                                  # NCHW (N, 1, H, W)


if __name__ == "__main__":
    key = jax.random.PRNGKey(0)
    x = jax.random.normal(key, (2, 3, 64, 64), jnp.float32)
    params = watersnet_params(seed=0)
    out = watersnet_forward(params, x)
    out = jax.block_until_ready(out)
    assert out.shape == (2, 1, 64, 64), out.shape
    assert bool(jnp.all(jnp.isfinite(out)))
    assert bool(jnp.all((out >= 0.0) & (out <= 1.0)))
    print("KERNEL_OK")
</pallas_src>

<mosaic_0001>
module attributes {stable_mosaic.version = 11 : i64} {
  func.func @kernel(%arg0: i32, %arg1: i32, %arg2: memref<512x256xbf16, #tpu.memory_space<vmem>>, %arg3: memref<256x128xbf16, #tpu.memory_space<vmem>>, %arg4: memref<2x128xf32, #tpu.memory_space<vmem>>, %arg5: memref<512x128xbf16, #tpu.memory_space<vmem>>) attributes {dimension_semantics = [#tpu.dimension_semantics<parallel>, #tpu.dimension_semantics<parallel>], iteration_bounds = array<i64: 4, 1>, scalar_prefetch = 0 : i64, scratch_operands = 0 : i64, tpu.core_type = #tpu.core_type<tc>, window_params = [{transform_indices = @transform_0, window_bounds = array<i64: 512, 256>}, {transform_indices = @transform_1, window_bounds = array<i64: 256, 128>}, {transform_indices = @transform_2, window_bounds = array<i64: 2, 128>}, {transform_indices = @transform_3, window_bounds = array<i64: 512, 128>}]} {
    %c0 = arith.constant 0 : index
    %c0_0 = arith.constant 0 : index
    %0 = vector.load %arg2[%c0, %c0_0] : memref<512x256xbf16, #tpu.memory_space<vmem>>, vector<512x256xbf16>
    %c0_1 = arith.constant 0 : index
    %c0_2 = arith.constant 0 : index
    %1 = vector.load %arg3[%c0_1, %c0_2] : memref<256x128xbf16, #tpu.memory_space<vmem>>, vector<256x128xbf16>
    %cst = arith.constant dense<0.000000e+00> : vector<512x128xf32>
    %2 = tpu.matmul %0, %1, %cst {dimension_numbers = #tpu.dot_dimension_numbers<[1], [0], [0], [1], [0, 0, 1, 1], [], []>} : vector<512x256xbf16>, vector<256x128xbf16>, vector<512x128xf32> -> vector<512x128xf32>
    %c0_3 = arith.constant 0 : index
    %c0_4 = arith.constant 0 : index
    %3 = vector.load %arg4[%c0_3, %c0_4] : memref<2x128xf32, #tpu.memory_space<vmem>>, vector<2x128xf32>
    %4 = vector.extract_strided_slice %3 {offsets = [0, 0], sizes = [1, 128], strides = [1, 1]} : vector<2x128xf32> to vector<1x128xf32>
    %5 = vector.broadcast %4 : vector<1x128xf32> to vector<512x128xf32>
    %6 = arith.mulf %2, %5 : vector<512x128xf32>
    %7 = vector.extract_strided_slice %3 {offsets = [1, 0], sizes = [1, 128], strides = [1, 1]} : vector<2x128xf32> to vector<1x128xf32>
    %8 = vector.broadcast %7 : vector<1x128xf32> to vector<512x128xf32>
    %9 = arith.addf %6, %8 : vector<512x128xf32>
    %cst_5 = arith.constant 0.000000e+00 : f32
    %10 = vector.broadcast %cst_5 : f32 to vector<512x128xf32>
    %11 = arith.maximumf %9, %10 : vector<512x128xf32>
    %12 = arith.truncf %11 : vector<512x128xf32> to vector<512x128xbf16>
    %c0_6 = arith.constant 0 : index
    %c0_7 = arith.constant 0 : index
    %13 = vector.load %arg5[%c0_6, %c0_7] : memref<512x128xbf16, #tpu.memory_space<vmem>>, vector<512x128xbf16>
    tpu.vector_store %arg5[%c0_6, %c0_7], %12 {strides = array<i32>} : memref<512x128xbf16, #tpu.memory_space<vmem>>, vector<512x128xbf16>,
    return
  }
  func.func @transform_0(%arg0: i32, %arg1: i32) -> (i32, i32) {
    %c0_i32 = arith.constant 0 : i32
    %c0_i32_0 = arith.constant 0 : i32
    return %arg0, %c0_i32 : i32, i32
  }
  func.func @transform_1(%arg0: i32, %arg1: i32) -> (i32, i32) {
    %c0_i32 = arith.constant 0 : i32
    %c0_i32_0 = arith.constant 0 : i32
    return %c0_i32, %arg1 : i32, i32
  }
  func.func @transform_2(%arg0: i32, %arg1: i32) -> (i32, i32) {
    %c0_i32 = arith.constant 0 : i32
    %c0_i32_0 = arith.constant 0 : i32
    return %c0_i32, %arg1 : i32, i32
  }
  func.func @transform_3(%arg0: i32, %arg1: i32) -> (i32, i32) {
    %c0_i32 = arith.constant 0 : i32
    return %arg0, %arg1 : i32, i32
  }
}

</mosaic_0001>

<llo_original>
// kernel: _conv_matmul_call.1
$region0: #{_conv_matmul_call.1}
  #allocation0 [shape = 'u32[]', space=smem, size = 0x4, offset = 0x4, fixed_abs, tag = 'smem constant byte address 0x4 - core index']
  #allocation1 [shape = 'u32[144,128]{1,0:T(1,128)}', space=vmem, size = 0x12000, scoped, tag = 'internal scratch']
  %s0 = inlined_call_operand.vmem [shape: bf16[2048,256], index: 0, kind: input, shape index: {}]
  %s1 = inlined_call_operand.vmem [shape: bf16[256,128], index: 1, kind: input, shape index: {}]
  %s2 = inlined_call_operand.vmem [shape: f32[2,128], index: 2, kind: input, shape index: {}]
  %s3 = inlined_call_operand.vmem [shape: bf16[2048,128], index: 3, kind: output, shape index: {}]
  %s4 = sld [smem:[#allocation0]]
  $region45: #{_conv_matmul_call.1} parent=0
    _
  %s6 = ssub.s32 1, %s4
  %s7 = scalar_select 0, %s6, %s4
  loop: start=0, step=1, limit=6
  $region2: #{_conv_matmul_call.1} parent=0 // loop_pre_header
    _
  $region3: #{_conv_matmul_call.1} parent=0 // loop_header
    %s9 = sphi 0, %s13
    %p10 = scmp.ge.s32.totalorder %s9, 6
    %s16 = sphi 0, %s28
    %s17 = sphi 0, %s24
    %s18 = sphi 0, %s16
    %s19 = sphi 0, %s17
    %s20 = sphi 0, %s18
    %s21 = sphi 0, %s19
    %s31 = sphi 0, %s33
    %s34 = sphi 0, %s31
    %s35 = sphi 0, %s34
    %s51 = sphi 0, %s35
    %s57 = sphi 0, %s59
    %s60 = sphi 0, %s57
    %s61 = sphi 0, %s60
    %s77 = sphi 0, %s61
    %s83 = sphi 0, %s85
    %s86 = sphi 0, %s83
    %s87 = sphi 0, %s86
    %s103 = sphi 0, %s87
    %s111 = sphi 0, %s113
    %s114 = sphi 0, %s111
    %s115 = sphi 0, %s114
    %s131 = sphi 0, %s115
  $region4: #{_conv_matmul_call.1} parent=0 // loop_header_branch
    %12 = sbr.rel (%p10) target = $region8
  $region5: #{_conv_matmul_call.1} parent=0 // loop_body
    %s14 = ssub.s32 %s9, 1
    %s15 = ssub.s32 %s9, 2
    %s22 = sadd.s32 1, %s17
    %p23 = scmp.ge.s32.totalorder %s22, 1
    %s24 = scalar_select %p23, 0, %s22
    %s25 = sadd.s32 1, %s16
    %s26 = scalar_select %p23, %s25, %s16
    %p27 = scmp.ge.s32.totalorder %s26, 4
    %s28 = scalar_select %p27, 0, %s26
    %s29 = ssub.s32 %s16, %s28
    %p30 = scmp.eq.s32.totalorder %s29, 0
    %s32 = sadd.s32 %s31, 1
    %s33 = scalar_select %p30, %s31, %s32
    %p36 = pneg %p30
    %p37 = scmp.eq.s32.totalorder %s9, 3
    %p38 = por %p36, %p37
    %p39 = scmp.ne.s32.totalorder %s31, %s34
    %p40 = scmp.eq.s32.totalorder %s9, 0
    %p41 = por %p39, %p40
    %p42 = scmp.ne.s32.totalorder %s31, %s34
    %p43 = scmp.eq.s32.totalorder %s14, 3
    %p44 = por %p42, %p43
    %p45 = scmp.ne.s32.totalorder %s34, %s35
    %p46 = scmp.eq.s32.totalorder %s14, 0
    %p47 = por %p45, %p46
    %p48 = scmp.ne.s32.totalorder %s34, %s35
    %p49 = scmp.eq.s32.totalorder %s15, 3
    %p50 = por %p48, %p49
    %p52 = scmp.ne.s32.totalorder %s35, %s51
    %p53 = scmp.eq.s32.totalorder %s15, 0
    %p54 = por %p52, %p53
    %s55 = ssub.s32 %s17, %s24
    %p56 = scmp.eq.s32.totalorder %s55, 0
    %s58 = sadd.s32 %s57, 1
    %s59 = scalar_select %p56, %s57, %s58
    %p62 = pneg %p56
    %p63 = scmp.eq.s32.totalorder %s9, 3
    %p64 = por %p62, %p63
    %p65 = scmp.ne.s32.totalorder %s57, %s60
    %p66 = scmp.eq.s32.totalorder %s9, 0
    %p67 = por %p65, %p66
    %p68 = scmp.ne.s32.totalorder %s57, %s60
    %p69 = scmp.eq.s32.totalorder %s14, 3
    %p70 = por %p68, %p69
    %p71 = scmp.ne.s32.totalorder %s60, %s61
    %p72 = scmp.eq.s32.totalorder %s14, 0
    %p73 = por %p71, %p72
    %p74 = scmp.ne.s32.totalorder %s60, %s61
    %p75 = scmp.eq.s32.totalorder %s15, 3
    %p76 = por %p74, %p75
    %p78 = scmp.ne.s32.totalorder %s61, %s77
    %p79 = scmp.eq.s32.totalorder %s15, 0
    %p80 = por %p78, %p79
    %s81 = ssub.s32 %s17, %s24
    %p82 = scmp.eq.s32.totalorder %s81, 0
    %s84 = sadd.s32 %s83, 1
    %s85 = scalar_select %p82, %s83, %s84
    %p88 = pneg %p82
    %p89 = scmp.eq.s32.totalorder %s9, 3
    %p90 = por %p88, %p89
    %p91 = scmp.ne.s32.totalorder %s83, %s86
    %p92 = scmp.eq.s32.totalorder %s9, 0
    %p93 = por %p91, %p92
    %p94 = scmp.ne.s32.totalorder %s83, %s86
    %p95 = scmp.eq.s32.totalorder %s14, 3
    %p96 = por %p94, %p95
    %p97 = scmp.ne.s32.totalorder %s86, %s87
    %p98 = scmp.eq.s32.totalorder %s14, 0
    %p99 = por %p97, %p98
    %p100 = scmp.ne.s32.totalorder %s86, %s87
    %p101 = scmp.eq.s32.totalorder %s15, 3
    %p102 = por %p100, %p101
    %p104 = scmp.ne.s32.totalorder %s87, %s103
    %p105 = scmp.eq.s32.totalorder %s15, 0
    %p106 = por %p104, %p105
    %s107 = ssub.s32 %s16, %s28
    %s108 = ssub.s32 %s17, %s24
    %s109 = sor.u32 %s107, %s108
    %p110 = scmp.eq.s32.totalorder %s109, 0
    %s112 = sadd.s32 %s111, 1
    %s113 = scalar_select %p110, %s111, %s112
    %p116 = pneg %p110
    %p117 = scmp.eq.s32.totalorder %s9, 3
    %p118 = por %p116, %p117
    %p119 = scmp.ne.s32.totalorder %s111, %s114
    %p120 = scmp.eq.s32.totalorder %s9, 0
    %p121 = por %p119, %p120
    %p122 = scmp.ne.s32.totalorder %s111, %s114
    %p123 = scmp.eq.s32.totalorder %s14, 3
    %p124 = por %p122, %p123
    %p125 = scmp.ne.s32.totalorder %s114, %s115
    %p126 = scmp.eq.s32.totalorder %s14, 0
    %p127 = por %p125, %p126
    %p128 = scmp.ne.s32.totalorder %s114, %s115
    %p129 = scmp.eq.s32.totalorder %s15, 3
    %p130 = por %p128, %p129
    %p132 = scmp.ne.s32.totalorder %s115, %s131
    %p133 = scmp.eq.s32.totalorder %s15, 0
    %p134 = por %p132, %p133
    %p135 = scmp.le.s32.totalorder 1, %s9
    %p136 = scmp.lt.s32.totalorder %s9, 5
    %p137 = pnand %p135, %p136
    %p138 = pneg %p137
    // Predicated region
    $region9: #{_conv_matmul_call.1} parent=5 // pred_check
      _
    $region10: #{_conv_matmul_call.1} parent=5 // pred_check_branch
      %140 = sbr.rel (%p137) target = $region12
    $region11: #{_conv_matmul_call.1} parent=5 // pred_region
      %s141 = ssub.s32 %s9, 1
      // Predicated region
      $region13: #{_conv_matmul_call.1} parent=11 // pred_check
        %p142 = pneg %p73
      $region14: #{_conv_matmul_call.1} parent=11 // pred_check_branch
        %144 = sbr.rel (%p142) target = $region16
      $region15: #{_conv_matmul_call.1} parent=11 // pred_region
        %p145 = scmp.lt.s32.totalorder %s19, 0
        %s146 = scalar_select %p145, %s19, 0
        %s147 = smul.addr %s146, 4
        %s148 = scalar_lea.vmem %s1, %s147
      $region16: #{_conv_matmul_call.1} parent=11 // pred_fallthru
        _
      // Predicated region
      $region17: #{_conv_matmul_call.1} parent=11 // pred_check
        %p149 = pneg %p99
      $region18: #{_conv_matmul_call.1} parent=11 // pred_check_branch
        %151 = sbr.rel (%p149) target = $region20
      $region19: #{_conv_matmul_call.1} parent=11 // pred_region
        %p152 = scmp.lt.s32.totalorder %s19, 0
        %s153 = scalar_select %p152, %s19, 0
        %s154 = smul.addr %s153, 2
        %s155 = scalar_lea.vmem %s2, %s154
      $region20: #{_conv_matmul_call.1} parent=11 // pred_fallthru
        _
    $region12: #{_conv_matmul_call.1} parent=5 // pred_fallthru
      _
    %p156 = scmp.lt.s32.totalorder %s9, 4
    // Predicated region
    $region21: #{_conv_matmul_call.1} parent=5 // pred_check
      %p157 = pneg %p156
    $region22: #{_conv_matmul_call.1} parent=5 // pred_check_branch
      %159 = sbr.rel (%p157) target = $region24
    $region23: #{_conv_matmul_call.1} parent=5 // pred_region
      // Predicated region
      $region25: #{_conv_matmul_call.1} parent=23 // pred_check
        %p160 = pneg %p41
      $region26: #{_conv_matmul_call.1} parent=23 // pred_check_branch
        %162 = sbr.rel (%p160) target = $region28
      $region27: #{_conv_matmul_call.1} parent=23 // pred_region
        %s163 = smul.u32 64, %s16
        %p164 = scmp.lt.s32.totalorder %s163, 255
        %s165 = scalar_select %p164, %s163, 255
        %s166 = smul.addr %s165, 2
        %s167 = smul.addr %s166, 4
        %s168 = scalar_lea.vmem %s0, %s167
        %s169 = smul.u32 64, %s16
      $region28: #{_conv_matmul_call.1} parent=23 // pred_fallthru
        _
    $region24: #{_conv_matmul_call.1} parent=5 // pred_fallthru
      _
    %p170 = scmp.le.s32.totalorder 1, %s9
    %p171 = scmp.lt.s32.totalorder %s9, 5
    %p172 = pnand %p170, %p171
    %p173 = pneg %p172
    // Predicated region
    $region29: #{_conv_matmul_call.1} parent=5 // pred_check
      _
    $region30: #{_conv_matmul_call.1} parent=5 // pred_check_branch
      %175 = sbr.rel (%p172) target = $region32
    $region31: #{_conv_matmul_call.1} parent=5 // pred_region
      %s176 = ssub.s32 %s9, 1
      %s177 = smul.u32 64, %s18
      %p178 = scmp.lt.s32.totalorder %s177, 255
      %s179 = scalar_select %p178, %s177, 255
      %s180 = smul.addr %s179, 2
      %s181 = smul.addr %s180, 4
      %s182 = scalar_lea.vmem %s0, %s181
      %p183 = pneg %p47
      %p184 = pneg %p44
      %p185 = scmp.lt.s32.totalorder %s19, 0
      %s186 = scalar_select %p185, %s19, 0
      %s187 = smul.addr %s186, 4
      %s188 = scalar_lea.vmem %s1, %s187
      %p189 = pneg %p73
      %p190 = pneg %p70
      %p191 = scmp.lt.s32.totalorder %s19, 0
      %s192 = scalar_select %p191, %s19, 0
      %s193 = smul.addr %s192, 2
      %s194 = scalar_lea.vmem %s2, %s193
      %p195 = pneg %p99
      %p196 = pneg %p96
      %p197 = pneg %p127
      %p198 = pneg %p124
      %s199 = smul.u32 64, %s18
      %p200 = scmp.lt.s32.totalorder %s199, 255
      %s201 = scalar_select %p200, %s199, 255
      %p202 = scmp.lt.s32.totalorder %s19, 0
      %s203 = scalar_select %p202, %s19, 0
      %s204 = sadd.s32 %s203, %s201
      %s205 = smul.addr %s204, 4
      %s206 = scalar_lea.vmem %s3, %s205
      %s207 = smul.u32 64, %s18
      %p208 = scmp.lt.s32.totalorder %s207, 255
      %s209 = scalar_select %p208, %s207, 255
      %s210 = smul.addr %s209, 2
      %s211 = smul.addr %s210, 4
      %s212 = scalar_lea.vmem %s0, %s211
      %s213 = smul.u32 64, %s18
      %p214 = scmp.lt.s32.totalorder %s19, 0
      %s215 = scalar_select %p214, %s19, 0
      %s216 = smul.addr %s215, 4
      %s217 = scalar_lea.vmem %s1, %s216
      %p218 = scmp.lt.s32.totalorder %s19, 0
      %s219 = scalar_select %p218, %s19, 0
      %s220 = smul.addr %s219, 2
      %s221 = scalar_lea.vmem %s2, %s220
      %s222 = smul.u32 64, %s18
      %p223 = scmp.lt.s32.totalorder %s222, 255
      %s224 = scalar_select %p223, %s222, 255
      %p225 = scmp.lt.s32.totalorder %s19, 0
      %s226 = scalar_select %p225, %s19, 0
      %s227 = sadd.s32 %s226, %s224
      %s228 = smul.addr %s227, 4
      %s229 = scalar_lea.vmem %s3, %s228
      %s230 = smul.u32 64, %s18
      %v232 = vld [vmem:[%s212] sm:$0xff]
      %v233 = vld [vmem:[%s212 + $0x8] sm:$0xff]
      %v234 = vld [vmem:[%s212 + $0x10] sm:$0xff]
      %v235 = vld [vmem:[%s212 + $0x18] sm:$0xff]
      %v236 = vld [vmem:[%s212 + $0x20] sm:$0xff]
      %v237 = vld [vmem:[%s212 + $0x28] sm:$0xff]
      %v238 = vld [vmem:[%s212 + $0x30] sm:$0xff]
      %v239 = vld [vmem:[%s212 + $0x38] sm:$0xff]
      %v240 = vld [vmem:[%s212 + $0x40] sm:$0xff]
      %v241 = vld [vmem:[%s212 + $0x48] sm:$0xff]
      %v242 = vld [vmem:[%s212 + $0x50] sm:$0xff]
      %v243 = vld [vmem:[%s212 + $0x58] sm:$0xff]
      %v244 = vld [vmem:[%s212 + $0x60] sm:$0xff]
      %v245 = vld [vmem:[%s212 + $0x68] sm:$0xff]
      %v246 = vld [vmem:[%s212 + $0x70] sm:$0xff]
      %v247 = vld [vmem:[%s212 + $0x78] sm:$0xff]
      %v248 = vld [vmem:[%s212 + $0x80] sm:$0xff]
      %v249 = vld [vmem:[%s212 + $0x88] sm:$0xff]
      %v250 = vld [vmem:[%s212 + $0x90] sm:$0xff]
      %v251 = vld [vmem:[%s212 + $0x98] sm:$0xff]
      %v252 = vld [vmem:[%s212 + $0xa0] sm:$0xff]
      %v253 = vld [vmem:[%s212 + $0xa8] sm:$0xff]
      %v254 = vld [vmem:[%s212 + $0xb0] sm:$0xff]
      %v255 = vld [vmem:[%s212 + $0xb8] sm:$0xff]
      %v256 = vld [vmem:[%s212 + $0xc0] sm:$0xff]
      %v257 = vld [vmem:[%s212 + $0xc8] sm:$0xff]
      %v258 = vld [vmem:[%s212 + $0xd0] sm:$0xff]
      %v259 = vld [vmem:[%s212 + $0xd8] sm:$0xff]
      %v260 = vld [vmem:[%s212 + $0xe0] sm:$0xff]
      %v261 = vld [vmem:[%s212 + $0xe8] sm:$0xff]
      %v262 = vld [vmem:[%s212 + $0xf0] sm:$0xff]
      %v263 = vld [vmem:[%s212 + $0xf8] sm:$0xff]
      %v264 = vld [vmem:[%s212 + $0x100] sm:$0xff]
      %v265 = vld [vmem:[%s212 + $0x108] sm:$0xff]
      %v266 = vld [vmem:[%s212 + $0x110] sm:$0xff]
      %v267 = vld [vmem:[%s212 + $0x118] sm:$0xff]
      %v268 = vld [vmem:[%s212 + $0x120] sm:$0xff]
      %v269 = vld [vmem:[%s212 + $0x128] sm:$0xff]
      %v270 = vld [vmem:[%s212 + $0x130] sm:$0xff]
      %v271 = vld [vmem:[%s212 + $0x138] sm:$0xff]
      %v272 = vld [vmem:[%s212 + $0x140] sm:$0xff]
      %v273 = vld [vmem:[%s212 + $0x148] sm:$0xff]
      %v274 = vld [vmem:[%s212 + $0x150] sm:$0xff]
      %v275 = vld [vmem:[%s212 + $0x158] sm:$0xff]
      %v276 = vld [vmem:[%s212 + $0x160] sm:$0xff]
      %v277 = vld [vmem:[%s212 + $0x168] sm:$0xff]
      %v278 = vld [vmem:[%s212 + $0x170] sm:$0xff]
      %v279 = vld [vmem:[%s212 + $0x178] sm:$0xff]
      %v280 = vld [vmem:[%s212 + $0x180] sm:$0xff]
      %v281 = vld [vmem:[%s212 + $0x188] sm:$0xff]
      %v282 = vld [vmem:[%s212 + $0x190] sm:$0xff]
      %v283 = vld [vmem:[%s212 + $0x198] sm:$0xff]
      %v284 = vld [vmem:[%s212 + $0x1a0] sm:$0xff]
      %v285 = vld [vmem:[%s212 + $0x1a8] sm:$0xff]
      %v286 = vld [vmem:[%s212 + $0x1b0] sm:$0xff]
      %v287 = vld [vmem:[%s212 + $0x1b8] sm:$0xff]
      %v288 = vld [vmem:[%s212 + $0x1c0] sm:$0xff]
      %v289 = vld [vmem:[%s212 + $0x1c8] sm:$0xff]
      %v290 = vld [vmem:[%s212 + $0x1d0] sm:$0xff]
      %v291 = vld [vmem:[%s212 + $0x1d8] sm:$0xff]
      %v292 = vld [vmem:[%s212 + $0x1e0] sm:$0xff]
      %v293 = vld [vmem:[%s212 + $0x1e8] sm:$0xff]
      %v294 = vld [vmem:[%s212 + $0x1f0] sm:$0xff]
      %v295 = vld [vmem:[%s212 + $0x1f8] sm:$0xff]
      %v296 = vld [vmem:[%s217] sm:$0xf]
      %v297 = vld [vmem:[%s217 + $0x4] sm:$0xf]
      %v298 = vld [vmem:[%s217 + $0x8] sm:$0xf]
      %v299 = vld [vmem:[%s217 + $0xc] sm:$0xf]
      %v300 = vld [vmem:[%s217 + $0x10] sm:$0xf]
      %v301 = vld [vmem:[%s217 + $0x14] sm:$0xf]
      %v302 = vld [vmem:[%s217 + $0x18] sm:$0xf]
      %v303 = vld [vmem:[%s217 + $0x1c] sm:$0xf]
      %v304 = vld [vmem:[%s217 + $0x20] sm:$0xf]
      %v305 = vld [vmem:[%s217 + $0x24] sm:$0xf]
      %v306 = vld [vmem:[%s217 + $0x28] sm:$0xf]
      %v307 = vld [vmem:[%s217 + $0x2c] sm:$0xf]
      %v308 = vld [vmem:[%s217 + $0x30] sm:$0xf]
      %v309 = vld [vmem:[%s217 + $0x34] sm:$0xf]
      %v310 = vld [vmem:[%s217 + $0x38] sm:$0xf]
      %v311 = vld [vmem:[%s217 + $0x3c] sm:$0xf]
      %v312 = vld [vmem:[%s217 + $0x40] sm:$0xf]
      %v313 = vld [vmem:[%s217 + $0x44] sm:$0xf]
      %v314 = vld [vmem:[%s217 + $0x48] sm:$0xf]
      %v315 = vld [vmem:[%s217 + $0x4c] sm:$0xf]
      %v316 = vld [vmem:[%s217 + $0x50] sm:$0xf]
      %v317 = vld [vmem:[%s217 + $0x54] sm:$0xf]
      %v318 = vld [vmem:[%s217 + $0x58] sm:$0xf]
      %v319 = vld [vmem:[%s217 + $0x5c] sm:$0xf]
      %v320 = vld [vmem:[%s217 + $0x60] sm:$0xf]
      %v321 = vld [vmem:[%s217 + $0x64] sm:$0xf]
      %v322 = vld [vmem:[%s217 + $0x68] sm:$0xf]
      %v323 = vld [vmem:[%s217 + $0x6c] sm:$0xf]
      %v324 = vld [vmem:[%s217 + $0x70] sm:$0xf]
      %v325 = vld [vmem:[%s217 + $0x74] sm:$0xf]
      %v326 = vld [vmem:[%s217 + $0x78] sm:$0xf]
      %v327 = vld [vmem:[%s217 + $0x7c] sm:$0xf]
      %v392 = vunpack.c.l.b16 %v232
      %v393 = vunpack.c.h.b16 %v232
      %v394 = vunpack.c.l.b16 %v233
      %v395 = vunpack.c.h.b16 %v233
      %v396 = vunpack.c.l.b16 %v234
      %v397 = vunpack.c.h.b16 %v234
      %v398 = vunpack.c.l.b16 %v235
      %v399 = vunpack.c.h.b16 %v235
      %v400 = vunpack.c.l.b16 %v236
      %v401 = vunpack.c.h.b16 %v236
      %v402 = vunpack.c.l.b16 %v237
      %v403 = vunpack.c.h.b16 %v237
      %v404 = vunpack.c.l.b16 %v238
      %v405 = vunpack.c.h.b16 %v238
      %v406 = vunpack.c.l.b16 %v239
      %v407 = vunpack.c.h.b16 %v239
      %v408 = vunpack.c.l.b16 %v240
      %v409 = vunpack.c.h.b16 %v240
      %v410 = vunpack.c.l.b16 %v241
      %v411 = vunpack.c.h.b16 %v241
      %v412 = vunpack.c.l.b16 %v242
      %v413 = vunpack.c.h.b16 %v242
      %v414 = vunpack.c.l.b16 %v243
      %v415 = vunpack.c.h.b16 %v243
      %v416 = vunpack.c.l.b16 %v244
      %v417 = vunpack.c.h.b16 %v244
      %v418 = vunpack.c.l.b16 %v245
      %v419 = vunpack.c.h.b16 %v245
      %v420 = vunpack.c.l.b16 %v246
      %v421 = vunpack.c.h.b16 %v246
      %v422 = vunpack.c.l.b16 %v247
      %v423 = vunpack.c.h.b16 %v247
      %v424 = vunpack.c.l.b16 %v248
      %v425 = vunpack.c.h.b16 %v248
      %v426 = vunpack.c.l.b16 %v249
      %v427 = vunpack.c.h.b16 %v249
      %v428 = vunpack.c.l.b16 %v250
      %v429 = vunpack.c.h.b16 %v250
      %v430 = vunpack.c.l.b16 %v251
      %v431 = vunpack.c.h.b16 %v251
      %v432 = vunpack.c.l.b16 %v252
      %v433 = vunpack.c.h.b16 %v252
      %v434 = vunpack.c.l.b16 %v253
      %v435 = vunpack.c.h.b16 %v253
      %v436 = vunpack.c.l.b16 %v254
      %v437 = vunpack.c.h.b16 %v254
      %v438 = vunpack.c.l.b16 %v255
      %v439 = vunpack.c.h.b16 %v255
      %v440 = vunpack.c.l.b16 %v256
      %v441 = vunpack.c.h.b16 %v256
      %v442 = vunpack.c.l.b16 %v257
      %v443 = vunpack.c.h.b16 %v257
      %v444 = vunpack.c.l.b16 %v258
      %v445 = vunpack.c.h.b16 %v258
      %v446 = vunpack.c.l.b16 %v259
      %v447 = vunpack.c.h.b16 %v259
      %v448 = vunpack.c.l.b16 %v260
      %v449 = vunpack.c.h.b16 %v260
      %v450 = vunpack.c.l.b16 %v261
      %v451 = vunpack.c.h.b16 %v261
      %v452 = vunpack.c.l.b16 %v262
      %v453 = vunpack.c.h.b16 %v262
      %v454 = vunpack.c.l.b16 %v263
      %v455 = vunpack.c.h.b16 %v263
      %v456 = vunpack.c.l.b16 %v264
      %v457 = vunpack.c.h.b16 %v264
      %v458 = vunpack.c.l.b16 %v265
      %v459 = vunpack.c.h.b16 %v265
      %v460 = vunpack.c.l.b16 %v266
      %v461 = vunpack.c.h.b16 %v266
      %v462 = vunpack.c.l.b16 %v267
      %v463 = vunpack.c.h.b16 %v267
      %v464 = vunpack.c.l.b16 %v268
      %v465 = vunpack.c.h.b16 %v268
      %v466 = vunpack.c.l.b16 %v269
      %v467 = vunpack.c.h.b16 %v269
      %v468 = vunpack.c.l.b16 %v270
      %v469 = vunpack.c.h.b16 %v270
      %v470 = vunpack.c.l.b16 %v271
      %v471 = vunpack.c.h.b16 %v271
      %v472 = vunpack.c.l.b16 %v272
      %v473 = vunpack.c.h.b16 %v272
      %v474 = vunpack.c.l.b16 %v273
      %v475 = vunpack.c.h.b16 %v273
      %v476 = vunpack.c.l.b16 %v274
      %v477 = vunpack.c.h.b16 %v274
      %v478 = vunpack.c.l.b16 %v275
      %v479 = vunpack.c.h.b16 %v275
      %v480 = vunpack.c.l.b16 %v276
      %v481 = vunpack.c.h.b16 %v276
      %v482 = vunpack.c.l.b16 %v277
      %v483 = vunpack.c.h.b16 %v277
      %v484 = vunpack.c.l.b16 %v278
      %v485 = vunpack.c.h.b16 %v278
      %v486 = vunpack.c.l.b16 %v279
      %v487 = vunpack.c.h.b16 %v279
      %v488 = vunpack.c.l.b16 %v280
      %v489 = vunpack.c.h.b16 %v280
      %v490 = vunpack.c.l.b16 %v281
      %v491 = vunpack.c.h.b16 %v281
      %v492 = vunpack.c.l.b16 %v282
      %v493 = vunpack.c.h.b16 %v282
      %v494 = vunpack.c.l.b16 %v283
      %v495 = vunpack.c.h.b16 %v283
      %v496 = vunpack.c.l.b16 %v284
      %v497 = vunpack.c.h.b16 %v284
      %v498 = vunpack.c.l.b16 %v285
      %v499 = vunpack.c.h.b16 %v285
      %v500 = vunpack.c.l.b16 %v286
      %v501 = vunpack.c.h.b16 %v286
      %v502 = vunpack.c.l.b16 %v287
      %v503 = vunpack.c.h.b16 %v287
      %v504 = vunpack.c.l.b16 %v288
      %v505 = vunpack.c.h.b16 %v288
      %v506 = vunpack.c.l.b16 %v289
      %v507 = vunpack.c.h.b16 %v289
      %v508 = vunpack.c.l.b16 %v290
      %v509 = vunpack.c.h.b16 %v290
      %v510 = vunpack.c.l.b16 %v291
      %v511 = vunpack.c.h.b16 %v291
      %v512 = vunpack.c.l.b16 %v292
      %v513 = vunpack.c.h.b16 %v292
      %v514 = vunpack.c.l.b16 %v293
      %v515 = vunpack.c.h.b16 %v293
      %v516 = vunpack.c.l.b16 %v294
      %v517 = vunpack.c.h.b16 %v294
      %v518 = vunpack.c.l.b16 %v295
      %v519 = vunpack.c.h.b16 %v295
      %v520 = vpack.c.b16 %v394, %v392
      %v521 = vpack.c.b16 %v395, %v393
      %v522 = vpack.c.b16 %v398, %v396
      %v523 = vpack.c.b16 %v399, %v397
      %v524 = vpack.c.b16 %v402, %v400
      %v525 = vpack.c.b16 %v403, %v401
      %v526 = vpack.c.b16 %v406, %v404
      %v527 = vpack.c.b16 %v407, %v405
      %v528 = vpack.c.b16 %v410, %v408
      %v529 = vpack.c.b16 %v411, %v409
      %v530 = vpack.c.b16 %v414, %v412
      %v531 = vpack.c.b16 %v415, %v413
      %v532 = vpack.c.b16 %v418, %v416
      %v533 = vpack.c.b16 %v419, %v417
      %v534 = vpack.c.b16 %v422, %v420
      %v535 = vpack.c.b16 %v423, %v421
      %v536 = vpack.c.b16 %v426, %v424
      %v537 = vpack.c.b16 %v427, %v425
      %v538 = vpack.c.b16 %v430, %v428
      %v539 = vpack.c.b16 %v431, %v429
      %v540 = vpack.c.b16 %v434, %v432
      %v541 = vpack.c.b16 %v435, %v433
      %v542 = vpack.c.b16 %v438, %v436
      %v543 = vpack.c.b16 %v439, %v437
      %v544 = vpack.c.b16 %v442, %v440
      %v545 = vpack.c.b16 %v443, %v441
      %v546 = vpack.c.b16 %v446, %v444
      %v547 = vpack.c.b16 %v447, %v445
      %v548 = vpack.c.b16 %v450, %v448
      %v549 = vpack.c.b16 %v451, %v449
      %v550 = vpack.c.b16 %v454, %v452
      %v551 = vpack.c.b16 %v455, %v453
      %v552 = vpack.c.b16 %v458, %v456
      %v553 = vpack.c.b16 %v459, %v457
      %v554 = vpack.c.b16 %v462, %v460
      %v555 = vpack.c.b16 %v463, %v461
      %v556 = vpack.c.b16 %v466, %v464
      %v557 = vpack.c.b16 %v467, %v465
      %v558 = vpack.c.b16 %v470, %v468
      %v559 = vpack.c.b16 %v471, %v469
      %v560 = vpack.c.b16 %v474, %v472
      %v561 = vpack.c.b16 %v475, %v473
      %v562 = vpack.c.b16 %v478, %v476
      %v563 = vpack.c.b16 %v479, %v477
      %v564 = vpack.c.b16 %v482, %v480
      %v565 = vpack.c.b16 %v483, %v481
      %v566 = vpack.c.b16 %v486, %v484
      %v567 = vpack.c.b16 %v487, %v485
      %v568 = vpack.c.b16 %v490, %v488
      %v569 = vpack.c.b16 %v491, %v489
      %v570 = vpack.c.b16 %v494, %v492
      %v571 = vpack.c.b16 %v495, %v493
      %v572 = vpack.c.b16 %v498, %v496
      %v573 = vpack.c.b16 %v499, %v497
      %v574 = vpack.c.b16 %v502, %v500
      %v575 = vpack.c.b16 %v503, %v501
      %v576 = vpack.c.b16 %v506, %v504
      %v577 = vpack.c.b16 %v507, %v505
      %v578 = vpack.c.b16 %v510, %v508
      %v579 = vpack.c.b16 %v511, %v509
      %v580 = vpack.c.b16 %v514, %v512
      %v581 = vpack.c.b16 %v515, %v513
      %v582 = vpack.c.b16 %v518, %v516
      %v583 = vpack.c.b16 %v519, %v517
      %v680 = vunpack.c.l.b16 %v296
      %v681 = vunpack.c.l.b16 %v297
      %v682 = vunpack.c.l.b16 %v298
      %v683 = vunpack.c.l.b16 %v299
      %v684 = vunpack.c.l.b16 %v300
      %v685 = vunpack.c.l.b16 %v301
      %v686 = vunpack.c.l.b16 %v302
      %v687 = vunpack.c.l.b16 %v303
      %v688 = vunpack.c.l.b16 %v304
      %v689 = vunpack.c.l.b16 %v305
      %v690 = vunpack.c.l.b16 %v306
      %v691 = vunpack.c.l.b16 %v307
      %v692 = vunpack.c.l.b16 %v308
      %v693 = vunpack.c.l.b16 %v309
      %v694 = vunpack.c.l.b16 %v310
      %v695 = vunpack.c.l.b16 %v311
      %v696 = vunpack.c.l.b16 %v312
      %v697 = vunpack.c.l.b16 %v313
      %v698 = vunpack.c.l.b16 %v314
      %v699 = vunpack.c.l.b16 %v315
      %v700 = vunpack.c.l.b16 %v316
      %v701 = vunpack.c.l.b16 %v317
      %v702 = vunpack.c.l.b16 %v318
      %v703 = vunpack.c.l.b16 %v319
      %v704 = vunpack.c.l.b16 %v320
      %v705 = vunpack.c.l.b16 %v321
      %v706 = vunpack.c.l.b16 %v322
      %v707 = vunpack.c.l.b16 %v323
      %v708 = vunpack.c.l.b16 %v324
      %v709 = vunpack.c.l.b16 %v325
      %v710 = vunpack.c.l.b16 %v326
      %v711 = vunpack.c.l.b16 %v327
      %v712 = vpack.c.b16 %v681, %v680
      %v713 = vpack.c.b16 %v683, %v682
      %v714 = vpack.c.b16 %v685, %v684
      %v715 = vpack.c.b16 %v687, %v686
      %v716 = vpack.c.b16 %v689, %v688
      %v717 = vpack.c.b16 %v691, %v690
      %v718 = vpack.c.b16 %v693, %v692
      %v719 = vpack.c.b16 %v695, %v694
      %v720 = vpack.c.b16 %v697, %v696
      %v721 = vpack.c.b16 %v699, %v698
      %v722 = vpack.c.b16 %v701, %v700
      %v723 = vpack.c.b16 %v703, %v702
      %v724 = vpack.c.b16 %v705, %v704
      %v725 = vpack.c.b16 %v707, %v706
      %v726 = vpack.c.b16 %v709, %v708
      %v727 = vpack.c.b16 %v711, %v710
      %744 = vmatprep.subr.bf16.mxu0 0
      %745 = vmatpush1.bf16.msra.mxu0 %v719
      %746 = vmatprep.subr.bf16.mxu0 0
      %747 = vmatpush1.bf16.msra.mxu0 %v718
      %748 = vmatprep.subr.bf16.mxu0 0
      %749 = vmatpush1.bf16.msra.mxu0 %v717
      %750 = vmatprep.subr.bf16.mxu0 0
      %751 = vmatpush1.bf16.msra.mxu0 %v716
      %752 = vmatprep.subr.bf16.mxu0 0
      %753 = vmatpush1.bf16.msra.mxu0 %v715
      %754 = vmatprep.subr.bf16.mxu0 0
      %755 = vmatpush1.bf16.msra.mxu0 %v714
      %756 = vmatprep.subr.bf16.mxu0 0
      %757 = vmatpush1.bf16.msra.mxu0 %v713
      %758 = vmatprep.subr.bf16.mxu0 0
      %759 = vmatpush1.bf16.msra.mxu0 %v712
      %760 = vmatprep.subr.bf16.mxu0 0
      %761 = vmatpush2.bf16.msra.mxu0 %v727
      %762 = vmatprep.subr.bf16.mxu0 0
      %763 = vmatpush2.bf16.msra.mxu0 %v726
      %764 = vmatprep.subr.bf16.mxu0 0
      %765 = vmatpush2.bf16.msra.mxu0 %v725
      %766 = vmatprep.subr.bf16.mxu0 0
      %767 = vmatpush2.bf16.msra.mxu0 %v724
      %768 = vmatprep.subr.bf16.mxu0 0
      %769 = vmatpush2.bf16.msra.mxu0 %v723
      %770 = vmatprep.subr.bf16.mxu0 0
      %771 = vmatpush2.bf16.msra.mxu0 %v722
      %772 = vmatprep.subr.bf16.mxu0 0
      %773 = vmatpush2.bf16.msra.mxu0 %v721
      %774 = vmatprep.subr.bf16.mxu0 0
      %775 = vmatpush2.bf16.msra.mxu0 %v720
      %776 = vmatprep.mubr.bf16.mxu0 %v521
      %777 = vmatmul.mubr.bf16.gmra.mxu0 %v520
      %v778 = vpop.f32.mrf.mxu0
      %v779 = vadd.f32 0.0, %v778
      %v780 = vpop.f32.mrf.mxu0
      %v781 = vpop.f32.mrf.mxu0
      %v782 = vadd.f32 0.0, %v781
      %v783 = vpop.f32.mrf.mxu0
      %784 = vmatprep.mubr.bf16.mxu0 %v523
      %785 = vmatmul.mubr.bf16.gmra.mxu0 %v522
      %v786 = vpop.f32.mrf.mxu0
      %v787 = vadd.f32 0.0, %v786
      %v788 = vpop.f32.mrf.mxu0
      %v789 = vpop.f32.mrf.mxu0
      %v790 = vadd.f32 0.0, %v789
      %v791 = vpop.f32.mrf.mxu0
      %792 = vmatprep.mubr.bf16.mxu0 %v525
      %793 = vmatmul.mubr.bf16.gmra.mxu0 %v524
      %v794 = vpop.f32.mrf.mxu0
      %v795 = vadd.f32 0.0, %v794
      %v796 = vpop.f32.mrf.mxu0
      %v797 = vpop.f32.mrf.mxu0
      %v798 = vadd.f32 0.0, %v797
      %v799 = vpop.f32.mrf.mxu0
      %800 = vmatprep.mubr.bf16.mxu0 %v527
      %801 = vmatmul.mubr.bf16.gmra.mxu0 %v526
      %v802 = vpop.f32.mrf.mxu0
      %v803 = vadd.f32 0.0, %v802
      %v804 = vpop.f32.mrf.mxu0
      %v805 = vpop.f32.mrf.mxu0
      %v806 = vadd.f32 0.0, %v805
      %v807 = vpop.f32.mrf.mxu0
      %808 = vmatprep.mubr.bf16.mxu0 %v529
      %809 = vmatmul.mubr.bf16.gmra.mxu0 %v528
      %v810 = vpop.f32.mrf.mxu0
      %v811 = vadd.f32 0.0, %v810
      %v812 = vpop.f32.mrf.mxu0
      %v813 = vpop.f32.mrf.mxu0
      %v814 = vadd.f32 0.0, %v813
      %v815 = vpop.f32.mrf.mxu0
      %816 = vmatprep.mubr.bf16.mxu0 %v531
      %817 = vmatmul.mubr.bf16.gmra.mxu0 %v530
      %v818 = vpop.f32.mrf.mxu0
      %v819 = vadd.f32 0.0, %v818
      %v820 = vpop.f32.mrf.mxu0
      %v821 = vpop.f32.mrf.mxu0
      %v822 = vadd.f32 0.0, %v821
      %v823 = vpop.f32.mrf.mxu0
      %824 = vmatprep.mubr.bf16.mxu0 %v533
      %825 = vmatmul.mubr.bf16.gmra.mxu0 %v532
      %v826 = vpop.f32.mrf.mxu0
      %v827 = vadd.f32 0.0, %v826
      %v828 = vpop.f32.mrf.mxu0
      %v829 = vpop.f32.mrf.mxu0
      %v830 = vadd.f32 0.0, %v829
      %v831 = vpop.f32.mrf.mxu0
      %832 = vmatprep.mubr.bf16.mxu0 %v535
      %833 = vmatmul.mubr.bf16.gmra.mxu0 %v534
      %v834 = vpop.f32.mrf.mxu0
      %v835 = vadd.f32 0.0, %v834
      %v836 = vpop.f32.mrf.mxu0
      %v837 = vpop.f32.mrf.mxu0
      %v838 = vadd.f32 0.0, %v837
      %v839 = vpop.f32.mrf.mxu0
      %840 = vmatprep.mubr.bf16.mxu0 %v537
      %841 = vmatmul.mubr.bf16.gmra.mxu0 %v536
      %v842 = vpop.f32.mrf.mxu0
      %v843 = vadd.f32 0.0, %v842
      %v844 = vpop.f32.mrf.mxu0
      %v845 = vpop.f32.mrf.mxu0
      %v846 = vadd.f32 0.0, %v845
      %v847 = vpop.f32.mrf.mxu0
      %848 = vmatprep.mubr.bf16.mxu0 %v539
      %849 = vmatmul.mubr.bf16.gmra.mxu0 %v538
      %v850 = vpop.f32.mrf.mxu0
      %v851 = vadd.f32 0.0, %v850
      %v852 = vpop.f32.mrf.mxu0
      %v853 = vpop.f32.mrf.mxu0
      %v854 = vadd.f32 0.0, %v853
      %v855 = vpop.f32.mrf.mxu0
      %856 = vmatprep.mubr.bf16.mxu0 %v541
      %857 = vmatmul.mubr.bf16.gmra.mxu0 %v540
      %v858 = vpop.f32.mrf.mxu0
      %v859 = vadd.f32 0.0, %v858
      %v860 = vpop.f32.mrf.mxu0
      %v861 = vpop.f32.mrf.mxu0
      %v862 = vadd.f32 0.0, %v861
      %v863 = vpop.f32.mrf.mxu0
      %864 = vmatprep.mubr.bf16.mxu0 %v543
      %865 = vmatmul.mubr.bf16.gmra.mxu0 %v542
      %v866 = vpop.f32.mrf.mxu0
      %v867 = vadd.f32 0.0, %v866
      %v868 = vpop.f32.mrf.mxu0
      %v869 = vpop.f32.mrf.mxu0
      %v870 = vadd.f32 0.0, %v869
      %v871 = vpop.f32.mrf.mxu0
      %872 = vmatprep.mubr.bf16.mxu0 %v545
      %873 = vmatmul.mubr.bf16.gmra.mxu0 %v544
      %v874 = vpop.f32.mrf.mxu0
      %v875 = vadd.f32 0.0, %v874
      %v876 = vpop.f32.mrf.mxu0
      %v877 = vpop.f32.mrf.mxu0
      %v878 = vadd.f32 0.0, %v877
      %v879 = vpop.f32.mrf.mxu0
      %880 = vmatprep.mubr.bf16.mxu0 %v547
      %881 = vmatmul.mubr.bf16.gmra.mxu0 %v546
      %v882 = vpop.f32.mrf.mxu0
      %v883 = vadd.f32 0.0, %v882
      %v884 = vpop.f32.mrf.mxu0
      %v885 = vpop.f32.mrf.mxu0
      %v886 = vadd.f32 0.0, %v885
      %v887 = vpop.f32.mrf.mxu0
      %888 = vmatprep.mubr.bf16.mxu0 %v549
      %889 = vmatmul.mubr.bf16.gmra.mxu0 %v548
      %v890 = vpop.f32.mrf.mxu0
      %v891 = vadd.f32 0.0, %v890
      %v892 = vpop.f32.mrf.mxu0
      %v893 = vpop.f32.mrf.mxu0
      %v894 = vadd.f32 0.0, %v893
      %v895 = vpop.f32.mrf.mxu0
      %896 = vmatprep.mubr.bf16.mxu0 %v551
      %897 = vmatmul.mubr.bf16.gmra.mxu0 %v550
      %v898 = vpop.f32.mrf.mxu0
      %v899 = vadd.f32 0.0, %v898
      %v900 = vpop.f32.mrf.mxu0
      %v901 = vpop.f32.mrf.mxu0
      %v902 = vadd.f32 0.0, %v901
      %v903 = vpop.f32.mrf.mxu0
      %904 = vmatprep.mubr.bf16.mxu0 %v553
      %905 = vmatmul.mubr.bf16.gmra.mxu0 %v552
      %v906 = vpop.f32.mrf.mxu0
      %v907 = vadd.f32 0.0, %v906
      %v908 = vpop.f32.mrf.mxu0
      %v909 = vpop.f32.mrf.mxu0
      %v910 = vadd.f32 0.0, %v909
      %v911 = vpop.f32.mrf.mxu0
      %912 = vmatprep.mubr.bf16.mxu0 %v555
      %913 = vmatmul.mubr.bf16.gmra.mxu0 %v554
      %v914 = vpop.f32.mrf.mxu0
      %v915 = vadd.f32 0.0, %v914
      %v916 = vpop.f32.mrf.mxu0
      %v917 = vpop.f32.mrf.mxu0
      %v918 = vadd.f32 0.0, %v917
      %v919 = vpop.f32.mrf.mxu0
      %920 = vmatprep.mubr.bf16.mxu0 %v557
      %921 = vmatmul.mubr.bf16.gmra.mxu0 %v556
      %v922 = vpop.f32.mrf.mxu0
      %v923 = vadd.f32 0.0, %v922
      %v924 = vpop.f32.mrf.mxu0
      %v925 = vpop.f32.mrf.mxu0
      %v926 = vadd.f32 0.0, %v925
      %v927 = vpop.f32.mrf.mxu0
      %928 = vmatprep.mubr.bf16.mxu0 %v559
      %929 = vmatmul.mubr.bf16.gmra.mxu0 %v558
      %v930 = vpop.f32.mrf.mxu0
      %v931 = vadd.f32 0.0, %v930
      %v932 = vpop.f32.mrf.mxu0
      %v933 = vpop.f32.mrf.mxu0
      %v934 = vadd.f32 0.0, %v933
      %v935 = vpop.f32.mrf.mxu0
      %936 = vmatprep.mubr.bf16.mxu0 %v561
      %937 = vmatmul.mubr.bf16.gmra.mxu0 %v560
      %v938 = vpop.f32.mrf.mxu0
      %v939 = vadd.f32 0.0, %v938
      %v940 = vpop.f32.mrf.mxu0
      %v941 = vpop.f32.mrf.mxu0
      %v942 = vadd.f32 0.0, %v941
      %v943 = vpop.f32.mrf.mxu0
      %944 = vmatprep.mubr.bf16.mxu0 %v563
      %945 = vmatmul.mubr.bf16.gmra.mxu0 %v562
      %v946 = vpop.f32.mrf.mxu0
      %v947 = vadd.f32 0.0, %v946
      %v948 = vpop.f32.mrf.mxu0
      %v949 = vpop.f32.mrf.mxu0
      %v950 = vadd.f32 0.0, %v949
      %v951 = vpop.f32.mrf.mxu0
      %952 = vmatprep.mubr.bf16.mxu0 %v565
      %953 = vmatmul.mubr.bf16.gmra.mxu0 %v564
      %v954 = vpop.f32.mrf.mxu0
      %v955 = vadd.f32 0.0, %v954
      %v956 = vpop.f32.mrf.mxu0
      %v957 = vpop.f32.mrf.mxu0
      %v958 = vadd.f32 0.0, %v957
      %v959 = vpop.f32.mrf.mxu0
      %960 = vmatprep.mubr.bf16.mxu0 %v567
      %961 = vmatmul.mubr.bf16.gmra.mxu0 %v566
      %v962 = vpop.f32.mrf.mxu0
      %v963 = vadd.f32 0.0, %v962
      %v964 = vpop.f32.mrf.mxu0
      %v965 = vpop.f32.mrf.mxu0
      %v966 = vadd.f32 0.0, %v965
      %v967 = vpop.f32.mrf.mxu0
      %968 = vmatprep.mubr.bf16.mxu0 %v569
      %969 = vmatmul.mubr.bf16.gmra.mxu0 %v568
      %v970 = vpop.f32.mrf.mxu0
      %v971 = vadd.f32 0.0, %v970
      %v972 = vpop.f32.mrf.mxu0
      %v973 = vpop.f32.mrf.mxu0
      %v974 = vadd.f32 0.0, %v973
      %v975 = vpop.f32.mrf.mxu0
      %976 = vmatprep.mubr.bf16.mxu0 %v571
      %977 = vmatmul.mubr.bf16.gmra.mxu0 %v570
      %v978 = vpop.f32.mrf.mxu0
      %v979 = vadd.f32 0.0, %v978
      %v980 = vpop.f32.mrf.mxu0
      %v981 = vpop.f32.mrf.mxu0
      %v982 = vadd.f32 0.0, %v981
      %v983 = vpop.f32.mrf.mxu0
      %984 = vmatprep.mubr.bf16.mxu0 %v573
      %985 = vmatmul.mubr.bf16.gmra.mxu0 %v572
      %v986 = vpop.f32.mrf.mxu0
      %v987 = vadd.f32 0.0, %v986
      %v988 = vpop.f32.mrf.mxu0
      %v989 = vpop.f32.mrf.mxu0
      %v990 = vadd.f32 0.0, %v989
      %v991 = vpop.f32.mrf.mxu0
      %992 = vmatprep.mubr.bf16.mxu0 %v575
      %993 = vmatmul.mubr.bf16.gmra.mxu0 %v574
      %v994 = vpop.f32.mrf.mxu0
      %v995 = vadd.f32 0.0, %v994
      %v996 = vpop.f32.mrf.mxu0
      %v997 = vpop.f32.mrf.mxu0
      %v998 = vadd.f32 0.0, %v997
      %v999 = vpop.f32.mrf.mxu0
      %1000 = vmatprep.mubr.bf16.mxu0 %v577
      %1001 = vmatmul.mubr.bf16.gmra.mxu0 %v576
      %v1002 = vpop.f32.mrf.mxu0
      %v1003 = vadd.f32 0.0, %v1002
      %v1004 = vpop.f32.mrf.mxu0
      %v1005 = vpop.f32.mrf.mxu0
      %v1006 = vadd.f32 0.0, %v1005
      %v1007 = vpop.f32.mrf.mxu0
      %1008 = vmatprep.mubr.bf16.mxu0 %v579
      %1009 = vmatmul.mubr.bf16.gmra.mxu0 %v578
      %v1010 = vpop.f32.mrf.mxu0
      %v1011 = vadd.f32 0.0, %v1010
      %v1012 = vpop.f32.mrf.mxu0
      %v1013 = vpop.f32.mrf.mxu0
      %v1014 = vadd.f32 0.0, %v1013
      %v1015 = vpop.f32.mrf.mxu0
      %1016 = vmatprep.mubr.bf16.mxu0 %v581
      %1017 = vmatmul.mubr.bf16.gmra.mxu0 %v580
      %v1018 = vpop.f32.mrf.mxu0
      %v1019 = vadd.f32 0.0, %v1018
      %v1020 = vpop.f32.mrf.mxu0
      %v1021 = vpop.f32.mrf.mxu0
      %v1022 = vadd.f32 0.0, %v1021
      %v1023 = vpop.f32.mrf.mxu0
      %1024 = vmatprep.mubr.bf16.mxu0 %v583
      %1025 = vmatmul.mubr.bf16.gmra.mxu0 %v582
      %v1026 = vpop.f32.mrf.mxu0
      %v1027 = vadd.f32 0.0, %v1026
      %v1028 = vpop.f32.mrf.mxu0
      %v1029 = vpop.f32.mrf.mxu0
      %v1030 = vadd.f32 0.0, %v1029
      %v1031 = vpop.f32.mrf.mxu0
      %1032 = vdwg.mxu0
      %v1033 = vld [vmem:[%s221] sm:$0x3]
      %v1034 = vlaneseq
      %v1035 = vshrl.u32 %v1034, 7
      %v1036 = vsub.s32 0, %v1035
      %v1037 = vrot.slane %v1033, %v1036
      %v1038 = vmul.f32 %v779, %v1037
      %v1039 = vmul.f32 %v782, %v1037
      %v1040 = vmul.f32 %v787, %v1037
      %v1041 = vmul.f32 %v790, %v1037
      %v1042 = vmul.f32 %v795, %v1037
      %v1043 = vmul.f32 %v798, %v1037
      %v1044 = vmul.f32 %v803, %v1037
      %v1045 = vmul.f32 %v806, %v1037
      %v1046 = vmul.f32 %v811, %v1037
      %v1047 = vmul.f32 %v814, %v1037
      %v1048 = vmul.f32 %v819, %v1037
      %v1049 = vmul.f32 %v822, %v1037
      %v1050 = vmul.f32 %v827, %v1037
      %v1051 = vmul.f32 %v830, %v1037
      %v1052 = vmul.f32 %v835, %v1037
      %v1053 = vmul.f32 %v838, %v1037
      %v1054 = vmul.f32 %v843, %v1037
      %v1055 = vmul.f32 %v846, %v1037
      %v1056 = vmul.f32 %v851, %v1037
      %v1057 = vmul.f32 %v854, %v1037
      %v1058 = vmul.f32 %v859, %v1037
      %v1059 = vmul.f32 %v862, %v1037
      %v1060 = vmul.f32 %v867, %v1037
      %v1061 = vmul.f32 %v870, %v1037
      %v1062 = vmul.f32 %v875, %v1037
      %v1063 = vmul.f32 %v878, %v1037
      %v1064 = vmul.f32 %v883, %v1037
      %v1065 = vmul.f32 %v886, %v1037
      %v1066 = vmul.f32 %v891, %v1037
      %v1067 = vmul.f32 %v894, %v1037
      %v1068 = vmul.f32 %v899, %v1037
      %v1069 = vmul.f32 %v902, %v1037
      %v1070 = vmul.f32 %v907, %v1037
      %v1071 = vmul.f32 %v910, %v1037
      %v1072 = vmul.f32 %v915, %v1037
      %v1073 = vmul.f32 %v918, %v1037
      %v1074 = vmul.f32 %v923, %v1037
      %v1075 = vmul.f32 %v926, %v1037
      %v1076 = vmul.f32 %v931, %v1037
      %v1077 = vmul.f32 %v934, %v1037
      %v1078 = vmul.f32 %v939, %v1037
      %v1079 = vmul.f32 %v942, %v1037
      %v1080 = vmul.f32 %v947, %v1037
      %v1081 = vmul.f32 %v950, %v1037
      %v1082 = vmul.f32 %v955, %v1037
      %v1083 = vmul.f32 %v958, %v1037
      %v1084 = vmul.f32 %v963, %v1037
      %v1085 = vmul.f32 %v966, %v1037
      %v1086 = vmul.f32 %v971, %v1037
      %v1087 = vmul.f32 %v974, %v1037
      %v1088 = vmul.f32 %v979, %v1037
      %v1089 = vmul.f32 %v982, %v1037
      %v1090 = vmul.f32 %v987, %v1037
      %v1091 = vmul.f32 %v990, %v1037
      %v1092 = vmul.f32 %v995, %v1037
      %v1093 = vmul.f32 %v998, %v1037
      %v1094 = vmul.f32 %v1003, %v1037
      %v1095 = vmul.f32 %v1006, %v1037
      %v1096 = vmul.f32 %v1011, %v1037
      %v1097 = vmul.f32 %v1014, %v1037
      %v1098 = vmul.f32 %v1019, %v1037
      %v1099 = vmul.f32 %v1022, %v1037
      %v1100 = vmul.f32 %v1027, %v1037
      %v1101 = vmul.f32 %v1030, %v1037
      %v1102 = vlaneseq
      %v1103 = vshrl.u32 %v1102, 7
      %v1104 = vsub.s32 1, %v1103
      %v1105 = vrot.slane %v1033, %v1104
      %v1106 = vadd.f32 %v1038, %v1105
      %v1107 = vadd.f32 %v1039, %v1105
      %v1108 = vadd.f32 %v1040, %v1105
      %v1109 = vadd.f32 %v1041, %v1105
      %v1110 = vadd.f32 %v1042, %v1105
      %v1111 = vadd.f32 %v1043, %v1105
      %v1112 = vadd.f32 %v1044, %v1105
      %v1113 = vadd.f32 %v1045, %v1105
      %v1114 = vadd.f32 %v1046, %v1105
      %v1115 = vadd.f32 %v1047, %v1105
      %v1116 = vadd.f32 %v1048, %v1105
      %v1117 = vadd.f32 %v1049, %v1105
      %v1118 = vadd.f32 %v1050, %v1105
      %v1119 = vadd.f32 %v1051, %v1105
      %v1120 = vadd.f32 %v1052, %v1105
      %v1121 = vadd.f32 %v1053, %v1105
      %v1122 = vadd.f32 %v1054, %v1105
      %v1123 = vadd.f32 %v1055, %v1105
      %v1124 = vadd.f32 %v1056, %v1105
      %v1125 = vadd.f32 %v1057, %v1105
      %v1126 = vadd.f32 %v1058, %v1105
      %v1127 = vadd.f32 %v1059, %v1105
      %v1128 = vadd.f32 %v1060, %v1105
      %v1129 = vadd.f32 %v1061, %v1105
      %v1130 = vadd.f32 %v1062, %v1105
      %v1131 = vadd.f32 %v1063, %v1105
      %v1132 = vadd.f32 %v1064, %v1105
      %v1133 = vadd.f32 %v1065, %v1105
      %v1134 = vadd.f32 %v1066, %v1105
      %v1135 = vadd.f32 %v1067, %v1105
      %v1136 = vadd.f32 %v1068, %v1105
      %v1137 = vadd.f32 %v1069, %v1105
      %v1138 = vadd.f32 %v1070, %v1105
      %v1139 = vadd.f32 %v1071, %v1105
      %v1140 = vadd.f32 %v1072, %v1105
      %v1141 = vadd.f32 %v1073, %v1105
      %v1142 = vadd.f32 %v1074, %v1105
      %v1143 = vadd.f32 %v1075, %v1105
      %v1144 = vadd.f32 %v1076, %v1105
      %v1145 = vadd.f32 %v1077, %v1105
      %v1146 = vadd.f32 %v1078, %v1105
      %v1147 = vadd.f32 %v1079, %v1105
      %v1148 = vadd.f32 %v1080, %v1105
      %v1149 = vadd.f32 %v1081, %v1105
      %v1150 = vadd.f32 %v1082, %v1105
      %v1151 = vadd.f32 %v1083, %v1105
      %v1152 = vadd.f32 %v1084, %v1105
      %v1153 = vadd.f32 %v1085, %v1105
      %v1154 = vadd.f32 %v1086, %v1105
      %v1155 = vadd.f32 %v1087, %v1105
      %v1156 = vadd.f32 %v1088, %v1105
      %v1157 = vadd.f32 %v1089, %v1105
      %v1158 = vadd.f32 %v1090, %v1105
      %v1159 = vadd.f32 %v1091, %v1105
      %v1160 = vadd.f32 %v1092, %v1105
      %v1161 = vadd.f32 %v1093, %v1105
      %v1162 = vadd.f32 %v1094, %v1105
      %v1163 = vadd.f32 %v1095, %v1105
      %v1164 = vadd.f32 %v1096, %v1105
      %v1165 = vadd.f32 %v1097, %v1105
      %v1166 = vadd.f32 %v1098, %v1105
      %v1167 = vadd.f32 %v1099, %v1105
      %v1168 = vadd.f32 %v1100, %v1105
      %v1169 = vadd.f32 %v1101, %v1105
      %v1170 = vmax.f32 %v1106, 0.0
      %v1171 = vmax.f32 %v1107, 0.0
      %v1172 = vmax.f32 %v1108, 0.0
      %v1173 = vmax.f32 %v1109, 0.0
      %v1174 = vmax.f32 %v1110, 0.0
      %v1175 = vmax.f32 %v1111, 0.0
      %v1176 = vmax.f32 %v1112, 0.0
      %v1177 = vmax.f32 %v1113, 0.0
      %v1178 = vmax.f32 %v1114, 0.0
      %v1179 = vmax.f32 %v1115, 0.0
      %v1180 = vmax.f32 %v1116, 0.0
      %v1181 = vmax.f32 %v1117, 0.0
      %v1182 = vmax.f32 %v1118, 0.0
      %v1183 = vmax.f32 %v1119, 0.0
      %v1184 = vmax.f32 %v1120, 0.0
      %v1185 = vmax.f32 %v1121, 0.0
      %v1186 = vmax.f32 %v1122, 0.0
      %v1187 = vmax.f32 %v1123, 0.0
      %v1188 = vmax.f32 %v1124, 0.0
      %v1189 = vmax.f32 %v1125, 0.0
      %v1190 = vmax.f32 %v1126, 0.0
      %v1191 = vmax.f32 %v1127, 0.0
      %v1192 = vmax.f32 %v1128, 0.0
      %v1193 = vmax.f32 %v1129, 0.0
      %v1194 = vmax.f32 %v1130, 0.0
      %v1195 = vmax.f32 %v1131, 0.0
      %v1196 = vmax.f32 %v1132, 0.0
      %v1197 = vmax.f32 %v1133, 0.0
      %v1198 = vmax.f32 %v1134, 0.0
      %v1199 = vmax.f32 %v1135, 0.0
      %v1200 = vmax.f32 %v1136, 0.0
      %v1201 = vmax.f32 %v1137, 0.0
      %v1202 = vmax.f32 %v1138, 0.0
      %v1203 = vmax.f32 %v1139, 0.0
      %v1204 = vmax.f32 %v1140, 0.0
      %v1205 = vmax.f32 %v1141, 0.0
      %v1206 = vmax.f32 %v1142, 0.0
      %v1207 = vmax.f32 %v1143, 0.0
      %v1208 = vmax.f32 %v1144, 0.0
      %v1209 = vmax.f32 %v1145, 0.0
      %v1210 = vmax.f32 %v1146, 0.0
      %v1211 = vmax.f32 %v1147, 0.0
      %v1212 = vmax.f32 %v1148, 0.0
      %v1213 = vmax.f32 %v1149, 0.0
      %v1214 = vmax.f32 %v1150, 0.0
      %v1215 = vmax.f32 %v1151, 0.0
      %v1216 = vmax.f32 %v1152, 0.0
      %v1217 = vmax.f32 %v1153, 0.0
      %v1218 = vmax.f32 %v1154, 0.0
      %v1219 = vmax.f32 %v1155, 0.0
      %v1220 = vmax.f32 %v1156, 0.0
      %v1221 = vmax.f32 %v1157, 0.0
      %v1222 = vmax.f32 %v1158, 0.0
      %v1223 = vmax.f32 %v1159, 0.0
      %v1224 = vmax.f32 %v1160, 0.0
      %v1225 = vmax.f32 %v1161, 0.0
      %v1226 = vmax.f32 %v1162, 0.0
      %v1227 = vmax.f32 %v1163, 0.0
      %v1228 = vmax.f32 %v1164, 0.0
      %v1229 = vmax.f32 %v1165, 0.0
      %v1230 = vmax.f32 %v1166, 0.0
      %v1231 = vmax.f32 %v1167, 0.0
      %v1232 = vmax.f32 %v1168, 0.0
      %v1233 = vmax.f32 %v1169, 0.0
      %v1234 = vpack.c.bf16 %v1171, %v1170
      %v1235 = vpack.c.bf16 %v1173, %v1172
      %v1236 = vpack.c.bf16 %v1175, %v1174
      %v1237 = vpack.c.bf16 %v1177, %v1176
      %v1238 = vpack.c.bf16 %v1179, %v1178
      %v1239 = vpack.c.bf16 %v1181, %v1180
      %v1240 = vpack.c.bf16 %v1183, %v1182
      %v1241 = vpack.c.bf16 %v1185, %v1184
      %v1242 = vpack.c.bf16 %v1187, %v1186
      %v1243 = vpack.c.bf16 %v1189, %v1188
      %v1244 = vpack.c.bf16 %v1191, %v1190
      %v1245 = vpack.c.bf16 %v1193, %v1192
      %v1246 = vpack.c.bf16 %v1195, %v1194
      %v1247 = vpack.c.bf16 %v1197, %v1196
      %v1248 = vpack.c.bf16 %v1199, %v1198
      %v1249 = vpack.c.bf16 %v1201, %v1200
      %v1250 = vpack.c.bf16 %v1203, %v1202
      %v1251 = vpack.c.bf16 %v1205, %v1204
      %v1252 = vpack.c.bf16 %v1207, %v1206
      %v1253 = vpack.c.bf16 %v1209, %v1208
      %v1254 = vpack.c.bf16 %v1211, %v1210
      %v1255 = vpack.c.bf16 %v1213, %v1212
      %v1256 = vpack.c.bf16 %v1215, %v1214
      %v1257 = vpack.c.bf16 %v1217, %v1216
      %v1258 = vpack.c.bf16 %v1219, %v1218
      %v1259 = vpack.c.bf16 %v1221, %v1220
      %v1260 = vpack.c.bf16 %v1223, %v1222
      %v1261 = vpack.c.bf16 %v1225, %v1224
      %v1262 = vpack.c.bf16 %v1227, %v1226
      %v1263 = vpack.c.bf16 %v1229, %v1228
      %v1264 = vpack.c.bf16 %v1231, %v1230
      %v1265 = vpack.c.bf16 %v1233, %v1232
      %v1298 = vunpack.c.l.b16 %v1234
      %v1299 = vunpack.c.h.b16 %v1234
      %v1300 = vunpack.c.l.b16 %v1235
      %v1301 = vunpack.c.h.b16 %v1235
      %v1302 = vunpack.c.l.b16 %v1236
      %v1303 = vunpack.c.h.b16 %v1236
      %v1304 = vunpack.c.l.b16 %v1237
      %v1305 = vunpack.c.h.b16 %v1237
      %v1306 = vunpack.c.l.b16 %v1238
      %v1307 = vunpack.c.h.b16 %v1238
      %v1308 = vunpack.c.l.b16 %v1239
      %v1309 = vunpack.c.h.b16 %v1239
      %v1310 = vunpack.c.l.b16 %v1240
      %v1311 = vunpack.c.h.b16 %v1240
      %v1312 = vunpack.c.l.b16 %v1241
      %v1313 = vunpack.c.h.b16 %v1241
      %v1314 = vunpack.c.l.b16 %v1242
      %v1315 = vunpack.c.h.b16 %v1242
      %v1316 = vunpack.c.l.b16 %v1243
      %v1317 = vunpack.c.h.b16 %v1243
      %v1318 = vunpack.c.l.b16 %v1244
      %v1319 = vunpack.c.h.b16 %v1244
      %v1320 = vunpack.c.l.b16 %v1245
      %v1321 = vunpack.c.h.b16 %v1245
      %v1322 = vunpack.c.l.b16 %v1246
      %v1323 = vunpack.c.h.b16 %v1246
      %v1324 = vunpack.c.l.b16 %v1247
      %v1325 = vunpack.c.h.b16 %v1247
      %v1326 = vunpack.c.l.b16 %v1248
      %v1327 = vunpack.c.h.b16 %v1248
      %v1328 = vunpack.c.l.b16 %v1249
      %v1329 = vunpack.c.h.b16 %v1249
      %v1330 = vunpack.c.l.b16 %v1250
      %v1331 = vunpack.c.h.b16 %v1250
      %v1332 = vunpack.c.l.b16 %v1251
      %v1333 = vunpack.c.h.b16 %v1251
      %v1334 = vunpack.c.l.b16 %v1252
      %v1335 = vunpack.c.h.b16 %v1252
      %v1336 = vunpack.c.l.b16 %v1253
      %v1337 = vunpack.c.h.b16 %v1253
      %v1338 = vunpack.c.l.b16 %v1254
      %v1339 = vunpack.c.h.b16 %v1254
      %v1340 = vunpack.c.l.b16 %v1255
      %v1341 = vunpack.c.h.b16 %v1255
      %v1342 = vunpack.c.l.b16 %v1256
      %v1343 = vunpack.c.h.b16 %v1256
      %v1344 = vunpack.c.l.b16 %v1257
      %v1345 = vunpack.c.h.b16 %v1257
      %v1346 = vunpack.c.l.b16 %v1258
      %v1347 = vunpack.c.h.b16 %v1258
      %v1348 = vunpack.c.l.b16 %v1259
      %v1349 = vunpack.c.h.b16 %v1259
      %v1350 = vunpack.c.l.b16 %v1260
      %v1351 = vunpack.c.h.b16 %v1260
      %v1352 = vunpack.c.l.b16 %v1261
      %v1353 = vunpack.c.h.b16 %v1261
      %v1354 = vunpack.c.l.b16 %v1262
      %v1355 = vunpack.c.h.b16 %v1262
      %v1356 = vunpack.c.l.b16 %v1263
      %v1357 = vunpack.c.h.b16 %v1263
      %v1358 = vunpack.c.l.b16 %v1264
      %v1359 = vunpack.c.h.b16 %v1264
      %v1360 = vunpack.c.l.b16 %v1265
      %v1361 = vunpack.c.h.b16 %v1265
      %v1362 = vpack.c.b16 %v1298, %v1298
      %v1363 = vpack.c.b16 %v1299, %v1299
      %v1364 = vpack.c.b16 %v1300, %v1300
      %v1365 = vpack.c.b16 %v1301, %v1301
      %v1366 = vpack.c.b16 %v1302, %v1302
      %v1367 = vpack.c.b16 %v1303, %v1303
      %v1368 = vpack.c.b16 %v1304, %v1304
      %v1369 = vpack.c.b16 %v1305, %v1305
      %v1370 = vpack.c.b16 %v1306, %v1306
      %v1371 = vpack.c.b16 %v1307, %v1307
      %v1372 = vpack.c.b16 %v1308, %v1308
      %v1373 = vpack.c.b16 %v1309, %v1309
      %v1374 = vpack.c.b16 %v1310, %v1310
      %v1375 = vpack.c.b16 %v1311, %v1311
      %v1376 = vpack.c.b16 %v1312, %v1312
      %v1377 = vpack.c.b16 %v1313, %v1313
      %v1378 = vpack.c.b16 %v1314, %v1314
      %v1379 = vpack.c.b16 %v1315, %v1315
      %v1380 = vpack.c.b16 %v1316, %v1316
      %v1381 = vpack.c.b16 %v1317, %v1317
      %v1382 = vpack.c.b16 %v1318, %v1318
      %v1383 = vpack.c.b16 %v1319, %v1319
      %v1384 = vpack.c.b16 %v1320, %v1320
      %v1385 = vpack.c.b16 %v1321, %v1321
      %v1386 = vpack.c.b16 %v1322, %v1322
      %v1387 = vpack.c.b16 %v1323, %v1323
      %v1388 = vpack.c.b16 %v1324, %v1324
      %v1389 = vpack.c.b16 %v1325, %v1325
      %v1390 = vpack.c.b16 %v1326, %v1326
      %v1391 = vpack.c.b16 %v1327, %v1327
      %v1392 = vpack.c.b16 %v1328, %v1328
      %v1393 = vpack.c.b16 %v1329, %v1329
      %v1394 = vpack.c.b16 %v1330, %v1330
      %v1395 = vpack.c.b16 %v1331, %v1331
      %v1396 = vpack.c.b16 %v1332, %v1332
      %v1397 = vpack.c.b16 %v1333, %v1333
      %v1398 = vpack.c.b16 %v1334, %v1334
      %v1399 = vpack.c.b16 %v1335, %v1335
      %v1400 = vpack.c.b16 %v1336, %v1336
      %v1401 = vpack.c.b16 %v1337, %v1337
      %v1402 = vpack.c.b16 %v1338, %v1338
      %v1403 = vpack.c.b16 %v1339, %v1339
      %v1404 = vpack.c.b16 %v1340, %v1340
      %v1405 = vpack.c.b16 %v1341, %v1341
      %v1406 = vpack.c.b16 %v1342, %v1342
      %v1407 = vpack.c.b16 %v1343, %v1343
      %v1408 = vpack.c.b16 %v1344, %v1344
      %v1409 = vpack.c.b16 %v1345, %v1345
      %v1410 = vpack.c.b16 %v1346, %v1346
      %v1411 = vpack.c.b16 %v1347, %v1347
      %v1412 = vpack.c.b16 %v1348, %v1348
      %v1413 = vpack.c.b16 %v1349, %v1349
      %v1414 = vpack.c.b16 %v1350, %v1350
      %v1415 = vpack.c.b16 %v1351, %v1351
      %v1416 = vpack.c.b16 %v1352, %v1352
      %v1417 = vpack.c.b16 %v1353, %v1353
      %v1418 = vpack.c.b16 %v1354, %v1354
      %v1419 = vpack.c.b16 %v1355, %v1355
      %v1420 = vpack.c.b16 %v1356, %v1356
      %v1421 = vpack.c.b16 %v1357, %v1357
      %v1422 = vpack.c.b16 %v1358, %v1358
      %v1423 = vpack.c.b16 %v1359, %v1359
      %v1424 = vpack.c.b16 %v1360, %v1360
      %v1425 = vpack.c.b16 %v1361, %v1361
      %1490 = vst [vmem:[%s229] sm:$0xf] %v1362
      %1491 = vst [vmem:[%s229 + $0x4] sm:$0xf] %v1363
      %1492 = vst [vmem:[%s229 + $0x8] sm:$0xf] %v1364
      %1493 = vst [vmem:[%s229 + $0xc] sm:$0xf] %v1365
      %1494 = vst [vmem:[%s229 + $0x10] sm:$0xf] %v1366
      %1495 = vst [vmem:[%s229 + $0x14] sm:$0xf] %v1367
      %1496 = vst [vmem:[%s229 + $0x18] sm:$0xf] %v1368
      %1497 = vst [vmem:[%s229 + $0x1c] sm:$0xf] %v1369
      %1498 = vst [vmem:[%s229 + $0x20] sm:$0xf] %v1370
      %1499 = vst [vmem:[%s229 + $0x24] sm:$0xf] %v1371
      %1500 = vst [vmem:[%s229 + $0x28] sm:$0xf] %v1372
      %1501 = vst [vmem:[%s229 + $0x2c] sm:$0xf] %v1373
      %1502 = vst [vmem:[%s229 + $0x30] sm:$0xf] %v1374
      %1503 = vst [vmem:[%s229 + $0x34] sm:$0xf] %v1375
      %1504 = vst [vmem:[%s229 + $0x38] sm:$0xf] %v1376
      %1505 = vst [vmem:[%s229 + $0x3c] sm:$0xf] %v1377
      %1506 = vst [vmem:[%s229 + $0x40] sm:$0xf] %v1378
      %1507 = vst [vmem:[%s229 + $0x44] sm:$0xf] %v1379
      %1508 = vst [vmem:[%s229 + $0x48] sm:$0xf] %v1380
      %1509 = vst [vmem:[%s229 + $0x4c] sm:$0xf] %v1381
      %1510 = vst [vmem:[%s229 + $0x50] sm:$0xf] %v1382
      %1511 = vst [vmem:[%s229 + $0x54] sm:$0xf] %v1383
      %1512 = vst [vmem:[%s229 + $0x58] sm:$0xf] %v1384
      %1513 = vst [vmem:[%s229 + $0x5c] sm:$0xf] %v1385
      %1514 = vst [vmem:[%s229 + $0x60] sm:$0xf] %v1386
      %1515 = vst [vmem:[%s229 + $0x64] sm:$0xf] %v1387
      %1516 = vst [vmem:[%s229 + $0x68] sm:$0xf] %v1388
      %1517 = vst [vmem:[%s229 + $0x6c] sm:$0xf] %v1389
      %1518 = vst [vmem:[%s229 + $0x70] sm:$0xf] %v1390
      %1519 = vst [vmem:[%s229 + $0x74] sm:$0xf] %v1391
      %1520 = vst [vmem:[%s229 + $0x78] sm:$0xf] %v1392
      %1521 = vst [vmem:[%s229 + $0x7c] sm:$0xf] %v1393
      %1522 = vst [vmem:[%s229 + $0x80] sm:$0xf] %v1394
      %1523 = vst [vmem:[%s229 + $0x84] sm:$0xf] %v1395
      %1524 = vst [vmem:[%s229 + $0x88] sm:$0xf] %v1396
      %1525 = vst [vmem:[%s229 + $0x8c] sm:$0xf] %v1397
      %1526 = vst [vmem:[%s229 + $0x90] sm:$0xf] %v1398
      %1527 = vst [vmem:[%s229 + $0x94] sm:$0xf] %v1399
      %1528 = vst [vmem:[%s229 + $0x98] sm:$0xf] %v1400
      %1529 = vst [vmem:[%s229 + $0x9c] sm:$0xf] %v1401
      %1530 = vst [vmem:[%s229 + $0xa0] sm:$0xf] %v1402
      %1531 = vst [vmem:[%s229 + $0xa4] sm:$0xf] %v1403
      %1532 = vst [vmem:[%s229 + $0xa8] sm:$0xf] %v1404
      %1533 = vst [vmem:[%s229 + $0xac] sm:$0xf] %v1405
      %1534 = vst [vmem:[%s229 + $0xb0] sm:$0xf] %v1406
      %1535 = vst [vmem:[%s229 + $0xb4] sm:$0xf] %v1407
      %1536 = vst [vmem:[%s229 + $0xb8] sm:$0xf] %v1408
      %1537 = vst [vmem:[%s229 + $0xbc] sm:$0xf] %v1409
      %1538 = vst [vmem:[%s229 + $0xc0] sm:$0xf] %v1410
      %1539 = vst [vmem:[%s229 + $0xc4] sm:$0xf] %v1411
      %1540 = vst [vmem:[%s229 + $0xc8] sm:$0xf] %v1412
      %1541 = vst [vmem:[%s229 + $0xcc] sm:$0xf] %v1413
      %1542 = vst [vmem:[%s229 + $0xd0] sm:$0xf] %v1414
      %1543 = vst [vmem:[%s229 + $0xd4] sm:$0xf] %v1415
      %1544 = vst [vmem:[%s229 + $0xd8] sm:$0xf] %v1416
      %1545 = vst [vmem:[%s229 + $0xdc] sm:$0xf] %v1417
      %1546 = vst [vmem:[%s229 + $0xe0] sm:$0xf] %v1418
      %1547 = vst [vmem:[%s229 + $0xe4] sm:$0xf] %v1419
      %1548 = vst [vmem:[%s229 + $0xe8] sm:$0xf] %v1420
      %1549 = vst [vmem:[%s229 + $0xec] sm:$0xf] %v1421
      %1550 = vst [vmem:[%s229 + $0xf0] sm:$0xf] %v1422
      %1551 = vst [vmem:[%s229 + $0xf4] sm:$0xf] %v1423
      %1552 = vst [vmem:[%s229 + $0xf8] sm:$0xf] %v1424
      %1553 = vst [vmem:[%s229 + $0xfc] sm:$0xf] %v1425
      %s1554 = smul.u32 64, %s18
      %p1555 = scmp.lt.s32.totalorder %s1554, 255
      %s1556 = scalar_select %p1555, %s1554, 255
      %p1557 = scmp.lt.s32.totalorder %s19, 0
      %s1558 = scalar_select %p1557, %s19, 0
      %s1559 = sadd.s32 %s1558, %s1556
      %s1560 = smul.addr %s1559, 4
      %s1561 = scalar_lea.vmem %s3, %s1560
      // Predicated region
      $region33: #{_conv_matmul_call.1} parent=31 // pred_check
        %p1562 = pneg %p124
      $region34: #{_conv_matmul_call.1} parent=31 // pred_check_branch
        %1564 = sbr.rel (%p1562) target = $region36
      $region35: #{_conv_matmul_call.1} parent=31 // pred_region
        %s1565 = smul.u32 64, %s18
      $region36: #{_conv_matmul_call.1} parent=31 // pred_fallthru
        _
    $region32: #{_conv_matmul_call.1} parent=5 // pred_fallthru
      _
    %p1566 = scmp.le.s32.totalorder 2, %s9
    // Predicated region
    $region37: #{_conv_matmul_call.1} parent=5 // pred_check
      %p1567 = pneg %p1566
    $region38: #{_conv_matmul_call.1} parent=5 // pred_check_branch
      %1569 = sbr.rel (%p1567) target = $region40
    $region39: #{_conv_matmul_call.1} parent=5 // pred_region
      %s1570 = ssub.s32 %s9, 2
      // Predicated region
      $region41: #{_conv_matmul_call.1} parent=39 // pred_check
        %p1571 = pneg %p130
      $region42: #{_conv_matmul_call.1} parent=39 // pred_check_branch
        %1573 = sbr.rel (%p1571) target = $region44
      $region43: #{_conv_matmul_call.1} parent=39 // pred_region
        %s1574 = smul.u32 64, %s20
        %p1575 = scmp.lt.s32.totalorder %s1574, 255
        %s1576 = scalar_select %p1575, %s1574, 255
        %p1577 = scmp.lt.s32.totalorder %s21, 0
        %s1578 = scalar_select %p1577, %s21, 0
        %s1579 = sadd.s32 %s1578, %s1576
        %s1580 = smul.addr %s1579, 4
        %s1581 = scalar_lea.vmem %s3, %s1580
      $region44: #{_conv_matmul_call.1} parent=39 // pred_fallthru
        _
    $region40: #{_conv_matmul_call.1} parent=5 // pred_fallthru
      _
  $region6: #{_conv_matmul_call.1} parent=0 // loop_footer
    %s13 = sadd.s32 1, %s9
  $region7: #{_conv_matmul_call.1} parent=0 // loop_footer_branch
    %8 = sbr.rel target = $region3
  $region8: #{_conv_matmul_call.1} parent=0 // loop_exit
    _

</llo_original>
